<compile_context>
chip_gen: v7x
topology: tpu7x:2x2x1
jax: 0.10.0
libtpu: 0.0.40
codegen_flags: <defaults>
</compile_context>

<pallas_src>
import math

import jax
import jax.numpy as jnp
from jax.experimental import pallas as pl
from jax.experimental.pallas import tpu as pltpu

_SQRT_2_OVER_PI = math.sqrt(2.0 / math.pi)


def _gelu_new(x):
    # NewGELUActivation: 0.5*x*(1+tanh(sqrt(2/pi)*(x + 0.044715*x^3)))
    x3 = x * x * x  # cubic on VPU slots; tanh owns the single EUP slot
    return 0.5 * x * (1.0 + jnp.tanh(_SQRT_2_OVER_PI * (x + 0.044715 * x3)))


def _round_up(x, m):
    return ((x + m - 1) // m) * m


# ---------------------------------------------------------------------------
# Hardware-aware configuration helpers.
# ---------------------------------------------------------------------------
def _chip_info():
    """(device_kind, vmem_capacity_bytes, has_bf16_vpu, multi_tensorcore)."""
    kind = ""
    try:
        kind = jax.devices()[0].device_kind.lower()
    except Exception:
        pass
    vmem_cap = None
    try:
        vmem_cap = int(pltpu.get_tpu_info().vmem_capacity_bytes)
    except Exception:
        vmem_cap = None
    if not vmem_cap or vmem_cap <= 0:
        vmem_cap = (64 << 20) if "v7" in kind else (128 << 20)
    # bf16 VPU/EUP exist on v6e and newer; keep GELU in f32 on v5 and older.
    bf16_vpu = not any(g in kind for g in ("v2", "v3", "v4", "v5"))
    # chips with >1 TensorCore sharing the grid's 'parallel' axes
    multi_tc = any(g in kind for g in ("v4", "v5p", "v7"))
    return kind, vmem_cap, bf16_vpu, multi_tc


_BUFFERED1 = None
_BUFFERED1_PROBED = False


def _buffered1_mode():
    """pl.Buffered(1) (single-buffered constant blocks) if this build supports it."""
    global _BUFFERED1, _BUFFERED1_PROBED
    if _BUFFERED1_PROBED:
        return _BUFFERED1
    _BUFFERED1_PROBED = True
    try:
        mode = pl.Buffered(1)

        def _probe_kernel(x_ref, w_ref, o_ref):
            o_ref[...] = x_ref[...] + w_ref[...]

        out = pl.pallas_call(
            _probe_kernel,
            out_shape=jax.ShapeDtypeStruct((16, 128), jnp.float32),
            grid=(2,),
            in_specs=[
                pl.BlockSpec((8, 128), lambda i: (i, 0)),
                pl.BlockSpec((8, 128), lambda i: (0, 0), pipeline_mode=mode),
            ],
            out_specs=pl.BlockSpec((8, 128), lambda i: (i, 0)),
        )(jnp.zeros((16, 128), jnp.float32), jnp.ones((8, 128), jnp.float32))
        jax.block_until_ready(out)
        _BUFFERED1 = mode
    except Exception:
        _BUFFERED1 = None
    return _BUFFERED1


def _pick_i_tile(I, target=1280, align=128):
    """Prefer an exact divisor of I (multiple of 128) <= target; else accept padding."""
    I_a = _round_up(I, align)
    if I_a <= target:
        return I_a
    best = 0
    t = align
    while t <= target:
        if I % t == 0 and t > best:
            best = t
        t += align
    if best >= 512:
        return best
    return min(target, I_a)


def _pick_row_tile(M, target, multi_tc):
    tm = max(8, min(int(target), _round_up(M, 8)))
    n = pl.cdiv(M, tm)
    if multi_tc and n < 2 and M > 8:
        n = 2  # let the 'parallel' row axis shard across the 2 TensorCores
    return _round_up(pl.cdiv(M, n), 8)


# ---------------------------------------------------------------------------
# Kernel A: weights fully VMEM-resident, grid over token-row tiles.
# The intermediate (I) dimension is chunked in-kernel with static ti-wide
# slices so only a (tm, ti) activation is live at a time (fits v7x's 64 MiB).
# ---------------------------------------------------------------------------
def _make_resident_kernel(n_chunks, ti, gelu_dtype):
    def kernel(x_ref, wfc_ref, bfc_ref, wproj_ref, bproj_ref, o_ref):
        tm = x_ref.shape[0]
        H = o_ref.shape[1]
        x = x_ref[...].astype(wfc_ref.dtype)
        acc = jnp.zeros((tm, H), jnp.float32)
        for c in range(n_chunks):                       # static offsets -> free views
            j0 = c * ti
            h = jnp.dot(x, wfc_ref[:, j0:j0 + ti],
                        preferred_element_type=jnp.float32)
            h = h + bfc_ref[:, j0:j0 + ti]              # bias in f32
            h = _gelu_new(h.astype(gelu_dtype))         # bf16 on v6e/v7x, f32 on v5e
            acc = acc + jnp.dot(h.astype(wproj_ref.dtype),
                                wproj_ref[j0:j0 + ti, :],
                                preferred_element_type=jnp.float32)
        o_ref[...] = (acc + bproj_ref[...]).astype(o_ref.dtype)  # dropout: identity

    return kernel


# ---------------------------------------------------------------------------
# Kernel B: intermediate dimension streamed over the second grid axis; c_proj
# partials accumulated into an f32 VMEM scratch.  Used when resident weights
# would not fit the generation's VMEM budget.
# ---------------------------------------------------------------------------
def _make_itiled_kernel(gelu_dtype):
    def kernel(x_ref, wfc_ref, bfc_ref, wproj_ref, bproj_ref, o_ref, acc_ref):
        j = pl.program_id(1)

        @pl.when(j == 0)
        def _init():
            acc_ref[...] = jnp.zeros_like(acc_ref)

        x = x_ref[...].astype(wfc_ref.dtype)
        h = jnp.dot(x, wfc_ref[...], preferred_element_type=jnp.float32)
        h = _gelu_new((h + bfc_ref[...]).astype(gelu_dtype))
        acc_ref[...] += jnp.dot(h.astype(wproj_ref.dtype), wproj_ref[...],
                                preferred_element_type=jnp.float32)

        @pl.when(j == pl.num_programs(1) - 1)
        def _finalize():
            o_ref[...] = (acc_ref[...] + bproj_ref[...]).astype(o_ref.dtype)

    return kernel


def gpt2_mlp(hidden_states, w_fc, b_fc, w_proj, b_proj, *,
             tm=None, ti=None,
             compute_dtype=jnp.bfloat16,
             out_dtype=None,
             vmem_budget_bytes=None,
             force_itiled=False):
    """GPT2MLP forward. hidden_states: (B, S, H) -> (B, S, H)."""
    B, S, H = hidden_states.shape
    I = w_fc.shape[1]
    if out_dtype is None:
        out_dtype = hidden_states.dtype
    M = B * S
    x2d = hidden_states.reshape(M, H)

    _, vmem_cap, bf16_vpu, multi_tc = _chip_info()
    if vmem_budget_bytes is None:
        vmem_budget_bytes = int(0.75 * vmem_cap)   # ~96 MiB v5e/v6e, ~48 MiB v7x
    vmem_limit_cap = int(0.90 * vmem_cap)          # headroom for Mosaic scratch

    gelu_dtype = compute_dtype if bf16_vpu else jnp.float32

    wbuf_mode = _buffered1_mode()                  # single-buffer constant weights
    wbuf = 1 if wbuf_mode is not None else 2

    w_item = jnp.dtype(compute_dtype).itemsize
    x_item = jnp.dtype(x2d.dtype).itemsize
    o_item = jnp.dtype(out_dtype).itemsize

    # --- intermediate-dim tile: prefer an exact divisor of I (no padded traffic).
    if ti is None:
        ti = _pick_i_tile(I)
    else:
        ti = max(128, (int(ti) // 128) * 128)
    I_pad = _round_up(I, ti)
    n_chunks = I_pad // ti

    # --- operand dtypes: bf16 matmul operands, f32 accumulation & biases.
    wfc_c = w_fc.astype(compute_dtype)
    wproj_c = w_proj.astype(compute_dtype)
    bfc2 = b_fc.reshape(1, I).astype(jnp.float32)
    bproj2 = b_proj.reshape(1, H).astype(jnp.float32)
    if I_pad != I:  # zero-padded I columns contribute exactly 0 (gelu_new(0)=0)
        wfc_c = jnp.pad(wfc_c, ((0, 0), (0, I_pad - I)))
        bfc2 = jnp.pad(bfc2, ((0, 0), (0, I_pad - I)))
        wproj_c = jnp.pad(wproj_c, ((0, I_pad - I), (0, 0)))

    # --- path selection: fully-resident weights vs streamed I tiles.
    tm_res = _pick_row_tile(M, tm if tm is not None else 512, multi_tc)
    resident_need = (wbuf * 2 * H * I_pad * w_item          # W_fc + W_proj resident
                     + wbuf * (I_pad + H) * 4               # biases (f32)
                     + 2 * tm_res * H * (x_item + o_item)   # 2-buffered x / out tiles
                     + 2 * tm_res * H * 4                   # f32 acc + pre-cast out
                     + tm_res * ti * (4 + 2 * w_item))      # per-chunk h + bf16 copies
    use_resident = (not force_itiled) and resident_need <= vmem_budget_bytes

    if use_resident:
        tm_sel = tm_res
        vmem_need = resident_need
    else:
        tm_target = tm if tm is not None else (1024 if vmem_cap >= (100 << 20) else 768)
        tm_sel = _pick_row_tile(M, tm_target, multi_tc)

        def _itiled_need(t):
            return (2 * 2 * H * ti * w_item            # streamed weight slices (2-buf)
                    + 2 * 2 * ti * 4 + wbuf * H * 4    # bias slices / resident b_proj
                    + 2 * t * H * (x_item + o_item)    # 2-buffered x / out tiles
                    + 2 * t * H * 4                    # f32 acc scratch + pre-cast out
                    + t * ti * (4 + 2 * w_item))       # h slice + bf16 copies

        while _itiled_need(tm_sel) > vmem_budget_bytes and tm_sel > 128:
            tm_sel = max(128, tm_sel - 128)
        vmem_need = _itiled_need(tm_sel)

    M_pad = _round_up(M, tm_sel)
    if M_pad != M:
        x2d = jnp.pad(x2d, ((0, M_pad - M), (0, 0)))
    grid_m = M_pad // tm_sel

    vmem_limit = int(min(max(int(1.35 * vmem_need) + (2 << 20), 32 << 20),
                         vmem_limit_cap))

    def wspec(shape, index_map):
        # Constant-index weights/biases: single-buffered when supported.
        if wbuf_mode is None:
            return pl.BlockSpec(shape, index_map)
        return pl.BlockSpec(shape, index_map, pipeline_mode=wbuf_mode)

    if use_resident:
        # NOTE: the first grid step blocks on the full weight DMA (exposed startup
        # cost for short/decode sequences).
        # TODO(synk): hide it behind the previous layer via a cross-pallas_call
        # semaphore + VMEM-ref prefetch when embedded in a full model.
        grid_spec = pltpu.PrefetchScalarGridSpec(
            num_scalar_prefetch=0,
            grid=(grid_m,),
            in_specs=[
                pl.BlockSpec((tm_sel, H), lambda i: (i, 0)),   # x tile
                wspec((H, I_pad), lambda i: (0, 0)),           # W_fc (resident)
                wspec((1, I_pad), lambda i: (0, 0)),           # b_fc
                wspec((I_pad, H), lambda i: (0, 0)),           # W_proj (resident)
                wspec((1, H), lambda i: (0, 0)),               # b_proj
            ],
            out_specs=pl.BlockSpec((tm_sel, H), lambda i: (i, 0)),
        )
        kernel_fn = _make_resident_kernel(n_chunks, ti, gelu_dtype)
        dim_sem = ("parallel",)
        bytes_accessed = int(M_pad * H * (x_item + o_item)
                             + 2 * H * I_pad * w_item + (I_pad + H) * 4)
    else:
        grid_spec = pltpu.PrefetchScalarGridSpec(
            num_scalar_prefetch=0,
            grid=(grid_m, I_pad // ti),
            in_specs=[
                pl.BlockSpec((tm_sel, H), lambda i, j: (i, 0)),  # x tile (reused over j)
                pl.BlockSpec((H, ti), lambda i, j: (0, j)),      # W_fc column slice
                pl.BlockSpec((1, ti), lambda i, j: (0, j)),      # b_fc slice
                pl.BlockSpec((ti, H), lambda i, j: (j, 0)),      # W_proj row slice
                wspec((1, H), lambda i, j: (0, 0)),              # b_proj (constant)
            ],
            out_specs=pl.BlockSpec((tm_sel, H), lambda i, j: (i, 0)),
            scratch_shapes=[pltpu.VMEM((tm_sel, H), jnp.float32)],
        )
        kernel_fn = _make_itiled_kernel(gelu_dtype)
        dim_sem = ("parallel", "arbitrary")
        bytes_accessed = int(M_pad * H * (x_item + o_item)
                             + grid_m * 2 * H * I_pad * w_item)

    cost = pl.CostEstimate(
        flops=int(4 * M_pad * H * I_pad),
        transcendentals=int(M_pad * I_pad),
        bytes_accessed=bytes_accessed,
    )

    out2d = pl.pallas_call(
        kernel_fn,
        out_shape=jax.ShapeDtypeStruct((M_pad, H), out_dtype),
        grid_spec=grid_spec,
        compiler_params=pltpu.CompilerParams(
            dimension_semantics=dim_sem,
            vmem_limit_bytes=vmem_limit),
        cost_estimate=cost,
    )(x2d, wfc_c, bfc2, wproj_c, bproj2)

    return out2d[:M].reshape(B, S, H)


def _reference_mlp(hidden_states, w_fc, b_fc, w_proj, b_proj):
    h = hidden_states @ w_fc + b_fc
    h = _gelu_new(h)
    return h @ w_proj + b_proj


if __name__ == "__main__":
    key = jax.random.PRNGKey(0)
    kx1, kx2, kx3, kwf, kwp = jax.random.split(key, 5)

    # GPT2-like toy config: hidden_size=128, intermediate=4*hidden=512
    H = 128
    I = 4 * H
    w_fc = 0.02 * jax.random.normal(kwf, (H, I), dtype=jnp.float32)
    b_fc = jnp.full((I,), 0.01, dtype=jnp.float32)
    w_proj = 0.02 * jax.random.normal(kwp, (I, H), dtype=jnp.float32)
    b_proj = jnp.full((H,), -0.02, dtype=jnp.float32)

    # --- Test 1: weights-resident fused path (f32 token I/O).
    B1, S1 = 2, 64
    x1 = jax.random.normal(kx1, (B1, S1, H), dtype=jnp.float32)
    out1 = jax.block_until_ready(gpt2_mlp(x1, w_fc, b_fc, w_proj, b_proj))
    ref1 = _reference_mlp(x1, w_fc, b_fc, w_proj, b_proj)
    assert out1.shape == (B1, S1, H)
    assert jnp.allclose(out1, ref1, atol=2e-2, rtol=2e-2), "resident path mismatch"

    # --- Test 2: I-streamed accumulator path (the big-weights fallback),
    #             with a token count NOT divisible by the row tile (padding).
    B2, S2 = 1, 50
    x2 = jax.random.normal(kx2, (B2, S2, H), dtype=jnp.float32)
    out2 = jax.block_until_ready(
        gpt2_mlp(x2, w_fc, b_fc, w_proj, b_proj, ti=256, force_itiled=True))
    ref2 = _reference_mlp(x2, w_fc, b_fc, w_proj, b_proj)
    assert out2.shape == (B2, S2, H)
    assert jnp.allclose(out2, ref2, atol=2e-2, rtol=2e-2), "I-tiled path mismatch"

    # --- Test 3: bf16 token I/O end-to-end (typical serving dtype).
    x3 = jax.random.normal(kx3, (B1, S1, H), dtype=jnp.float32).astype(jnp.bfloat16)
    out3 = jax.block_until_ready(gpt2_mlp(x3, w_fc, b_fc, w_proj, b_proj))
    ref3 = _reference_mlp(x3.astype(jnp.float32), w_fc, b_fc, w_proj, b_proj)
    assert out3.dtype == jnp.bfloat16
    assert jnp.allclose(out3.astype(jnp.float32), ref3, atol=3e-2, rtol=3e-2), \
        "bf16 I/O mismatch"

    print("KERNEL_OK")
</pallas_src>

<mosaic_0001>
module attributes {stable_mosaic.version = 11 : i64} {
  func.func @_probe_kernel(%arg0: i32, %arg1: memref<8x128xf32, #tpu.memory_space<vmem>>, %arg2: memref<8x128xf32, #tpu.memory_space<vmem>>, %arg3: memref<8x128xf32, #tpu.memory_space<vmem>>) attributes {dimension_semantics = [#tpu.dimension_semantics<arbitrary>], iteration_bounds = array<i64: 2>, scalar_prefetch = 0 : i64, scratch_operands = 0 : i64, tpu.core_type = #tpu.core_type<tc>, window_params = [{transform_indices = @transform_0, window_bounds = array<i64: 8, 128>}, {pipeline_mode = #tpu.pipeline_mode<synchronous>, transform_indices = @transform_1, window_bounds = array<i64: 8, 128>}, {transform_indices = @transform_2, window_bounds = array<i64: 8, 128>}]} {
    %c0 = arith.constant 0 : index
    %c0_0 = arith.constant 0 : index
    %0 = vector.load %arg1[%c0, %c0_0] : memref<8x128xf32, #tpu.memory_space<vmem>>, vector<8x128xf32>
    %c0_1 = arith.constant 0 : index
    %c0_2 = arith.constant 0 : index
    %1 = vector.load %arg2[%c0_1, %c0_2] : memref<8x128xf32, #tpu.memory_space<vmem>>, vector<8x128xf32>
    %2 = arith.addf %0, %1 : vector<8x128xf32>
    %c0_3 = arith.constant 0 : index
    %c0_4 = arith.constant 0 : index
    %3 = vector.load %arg3[%c0_3, %c0_4] : memref<8x128xf32, #tpu.memory_space<vmem>>, vector<8x128xf32>
    tpu.vector_store %arg3[%c0_3, %c0_4], %2 {strides = array<i32>} : memref<8x128xf32, #tpu.memory_space<vmem>>, vector<8x128xf32>,
    return
  }
  func.func @transform_0(%arg0: i32) -> (i32, i32) {
    %c0_i32 = arith.constant 0 : i32
    %c0_i32_0 = arith.constant 0 : i32
    return %arg0, %c0_i32 : i32, i32
  }
  func.func @transform_1(%arg0: i32) -> (i32, i32) {
    %c0_i32 = arith.constant 0 : i32
    %c0_i32_0 = arith.constant 0 : i32
    %c0_i32_1 = arith.constant 0 : i32
    return %c0_i32, %c0_i32_0 : i32, i32
  }
  func.func @transform_2(%arg0: i32) -> (i32, i32) {
    %c0_i32 = arith.constant 0 : i32
    %c0_i32_0 = arith.constant 0 : i32
    return %arg0, %c0_i32 : i32, i32
  }
}

module attributes {stable_mosaic.version = 11 : i64} {
  func.func @kernel(%arg0: i32, %arg1: memref<128x128xf32, #tpu.memory_space<vmem>>, %arg2: memref<128x512xbf16, #tpu.memory_space<vmem>>, %arg3: memref<1x512xf32, #tpu.memory_space<vmem>>, %arg4: memref<512x128xbf16, #tpu.memory_space<vmem>>, %arg5: memref<1x128xf32, #tpu.memory_space<vmem>>, %arg6: memref<128x128xf32, #tpu.memory_space<vmem>>) attributes {dimension_semantics = [#tpu.dimension_semantics<parallel>], iteration_bounds = array<i64: 1>, scalar_prefetch = 0 : i64, scratch_operands = 0 : i64, tpu.core_type = #tpu.core_type<tc>, window_params = [{transform_indices = @transform_0, window_bounds = array<i64: 128, 128>}, {pipeline_mode = #tpu.pipeline_mode<synchronous>, transform_indices = @transform_1, window_bounds = array<i64: 128, 512>}, {pipeline_mode = #tpu.pipeline_mode<synchronous>, transform_indices = @transform_2, window_bounds = array<i64: 1, 512>}, {pipeline_mode = #tpu.pipeline_mode<synchronous>, transform_indices = @transform_3, window_bounds = array<i64: 512, 128>}, {pipeline_mode = #tpu.pipeline_mode<synchronous>, transform_indices = @transform_4, window_bounds = array<i64: 1, 128>}, {transform_indices = @transform_5, window_bounds = array<i64: 128, 128>}]} {
    %c0 = arith.constant 0 : index
    %c0_0 = arith.constant 0 : index
    %0 = vector.load %arg1[%c0, %c0_0] : memref<128x128xf32, #tpu.memory_space<vmem>>, vector<128x128xf32>
    %1 = arith.truncf %0 : vector<128x128xf32> to vector<128x128xbf16>
    %cst = arith.constant 0.000000e+00 : f32
    %2 = vector.broadcast %cst : f32 to vector<128x128xf32>
    %c0_1 = arith.constant 0 : index
    %c0_2 = arith.constant 0 : index
    %3 = vector.load %arg2[%c0_1, %c0_2] : memref<128x512xbf16, #tpu.memory_space<vmem>>, vector<128x512xbf16>
    %cst_3 = arith.constant dense<0.000000e+00> : vector<128x512xf32>
    %4 = tpu.matmul %1, %3, %cst_3 {dimension_numbers = #tpu.dot_dimension_numbers<[1], [0], [0], [1], [0, 0, 1, 1], [], []>} : vector<128x128xbf16>, vector<128x512xbf16>, vector<128x512xf32> -> vector<128x512xf32>
    %c0_4 = arith.constant 0 : index
    %c0_5 = arith.constant 0 : index
    %5 = vector.load %arg3[%c0_4, %c0_5] : memref<1x512xf32, #tpu.memory_space<vmem>>, vector<1x512xf32>
    %6 = vector.broadcast %5 : vector<1x512xf32> to vector<128x512xf32>
    %7 = arith.addf %4, %6 : vector<128x512xf32>
    %8 = arith.truncf %7 : vector<128x512xf32> to vector<128x512xbf16>
    %9 = arith.mulf %8, %8 : vector<128x512xbf16>
    %10 = arith.mulf %9, %8 : vector<128x512xbf16>
    %cst_6 = arith.constant 5.000000e-01 : bf16
    %11 = vector.broadcast %cst_6 : bf16 to vector<128x512xbf16>
    %12 = arith.mulf %11, %8 : vector<128x512xbf16>
    %cst_7 = arith.constant 4.467770e-02 : bf16
    %13 = vector.broadcast %cst_7 : bf16 to vector<128x512xbf16>
    %14 = arith.mulf %13, %10 : vector<128x512xbf16>
    %15 = arith.addf %8, %14 : vector<128x512xbf16>
    %cst_8 = arith.constant 7.968750e-01 : bf16
    %16 = vector.broadcast %cst_8 : bf16 to vector<128x512xbf16>
    %17 = arith.mulf %16, %15 : vector<128x512xbf16>
    %18 = math.tanh %17 : vector<128x512xbf16>
    %cst_9 = arith.constant 1.000000e+00 : bf16
    %19 = vector.broadcast %cst_9 : bf16 to vector<128x512xbf16>
    %20 = arith.addf %19, %18 : vector<128x512xbf16>
    %21 = arith.mulf %12, %20 : vector<128x512xbf16>
    %c0_10 = arith.constant 0 : index
    %c0_11 = arith.constant 0 : index
    %22 = vector.load %arg4[%c0_10, %c0_11] : memref<512x128xbf16, #tpu.memory_space<vmem>>, vector<512x128xbf16>
    %cst_12 = arith.constant dense<0.000000e+00> : vector<128x128xf32>
    %23 = tpu.matmul %21, %22, %cst_12 {dimension_numbers = #tpu.dot_dimension_numbers<[1], [0], [0], [1], [0, 0, 1, 1], [], []>} : vector<128x512xbf16>, vector<512x128xbf16>, vector<128x128xf32> -> vector<128x128xf32>
    %24 = arith.addf %2, %23 : vector<128x128xf32>
    %c0_13 = arith.constant 0 : index
    %c0_14 = arith.constant 0 : index
    %25 = vector.load %arg5[%c0_13, %c0_14] : memref<1x128xf32, #tpu.memory_space<vmem>>, vector<1x128xf32>
    %26 = vector.broadcast %25 : vector<1x128xf32> to vector<128x128xf32>
    %27 = arith.addf %24, %26 : vector<128x128xf32>
    %c0_15 = arith.constant 0 : index
    %c0_16 = arith.constant 0 : index
    %28 = vector.load %arg6[%c0_15, %c0_16] : memref<128x128xf32, #tpu.memory_space<vmem>>, vector<128x128xf32>
    tpu.vector_store %arg6[%c0_15, %c0_16], %27 {strides = array<i32>} : memref<128x128xf32, #tpu.memory_space<vmem>>, vector<128x128xf32>,
    return
  }
  func.func @transform_0(%arg0: i32) -> (i32, i32) {
    %c0_i32 = arith.constant 0 : i32
    %c0_i32_0 = arith.constant 0 : i32
    return %arg0, %c0_i32 : i32, i32
  }
  func.func @transform_1(%arg0: i32) -> (i32, i32) {
    %c0_i32 = arith.constant 0 : i32
    %c0_i32_0 = arith.constant 0 : i32
    %c0_i32_1 = arith.constant 0 : i32
    return %c0_i32, %c0_i32_0 : i32, i32
  }
  func.func @transform_2(%arg0: i32) -> (i32, i32) {
    %c0_i32 = arith.constant 0 : i32
    %c0_i32_0 = arith.constant 0 : i32
    %c0_i32_1 = arith.constant 0 : i32
    return %c0_i32, %c0_i32_0 : i32, i32
  }
  func.func @transform_3(%arg0: i32) -> (i32, i32) {
    %c0_i32 = arith.constant 0 : i32
    %c0_i32_0 = arith.constant 0 : i32
    %c0_i32_1 = arith.constant 0 : i32
    return %c0_i32, %c0_i32_0 : i32, i32
  }
  func.func @transform_4(%arg0: i32) -> (i32, i32) {
    %c0_i32 = arith.constant 0 : i32
    %c0_i32_0 = arith.constant 0 : i32
    %c0_i32_1 = arith.constant 0 : i32
    return %c0_i32, %c0_i32_0 : i32, i32
  }
  func.func @transform_5(%arg0: i32) -> (i32, i32) {
    %c0_i32 = arith.constant 0 : i32
    %c0_i32_0 = arith.constant 0 : i32
    return %arg0, %c0_i32 : i32, i32
  }
}

</mosaic_0001>

<llo_original>
// kernel: tpu_custom_call.1
$region0: #{tpu_custom_call.1}
  #allocation0 [shape = 'u32[]', space=smem, size = 0x4, offset = 0x4, fixed_abs, tag = 'smem constant byte address 0x4 - core index']
  #allocation1 [shape = 'u32[144,128]{1,0:T(1,128)}', space=vmem, size = 0x12000, scoped, tag = 'internal scratch']
  %s0 = inlined_call_operand.hbm [shape: f32[16,128], index: 0, kind: input, shape index: {}]
  %s1 = inlined_call_operand.hbm [shape: f32[8,128], index: 1, kind: input, shape index: {}]
  %s2 = inlined_call_operand.hbm [shape: f32[16,128], index: 2, kind: output, shape index: {}]
  %s3 = sld [smem:[#allocation0]]
  $region49: #{tpu_custom_call.1} parent=0
    _
  %s5 = ssub.s32 1, %s3
  %s6 = scalar_select 0, %s5, %s3
  $region1: #{tpu_custom_call.1} parent=0
    #allocation2 [shape = 'u8[8192]{0}', space=vmem, size = 0x2000, scoped, tag = 'input window, operand 0']
    #allocation3 [shape = 's32[2]{0}', space=sflag, size = 0x8, scoped, tag = 'scoped memory for tpu_custom_call.1']
    #allocation4 [shape = 's32[2]{0}', space=sflag, size = 0x8, scoped, tag = 'scoped memory for tpu_custom_call.1']
    #allocation5 [shape = 'u8[4096]{0}', space=vmem, size = 0x1000, scoped, tag = 'input window, operand 1, single buffered']
    #allocation6 [shape = 's32[1]{0}', space=sflag, size = 0x4, scoped, tag = 'scoped memory for tpu_custom_call.1']
    #allocation7 [shape = 'u8[8192]{0}', space=vmem, size = 0x2000, scoped, tag = 'output window, operand 0']
    %7 = vsyncpa [#allocation3], 0
    %s8 = scalar_lea.sflag [#allocation3], 1
    %9 = vsyncpa %s8, 0
    %10 = vsyncpa [#allocation6], 0
    %11 = vsyncpa [#allocation4], 0
    %s12 = scalar_lea.sflag [#allocation4], 1
    %13 = vsyncpa %s12, 0
    loop: start=0, step=1, limit=4
    $region2: #{tpu_custom_call.1} parent=1 // loop_pre_header
      _
    $region3: #{tpu_custom_call.1} parent=1 // loop_header
      %s15 = sphi 0, %s19
      %p16 = scmp.ge.s32.totalorder %s15, 4
      %s25 = sphi 0, %s27
      %s28 = sphi 0, %s25
      %s29 = sphi 0, %s28
      %s45 = sphi 0, %s29
      %s49 = sphi 0, %s49
      %s51 = sphi 0, %s49
      %s52 = sphi 0, %s51
      %s66 = sphi 0, %s52
      %s72 = sphi 0, %s74
      %s75 = sphi 0, %s72
      %s76 = sphi 0, %s75
      %s92 = sphi 0, %s76
    $region4: #{tpu_custom_call.1} parent=1 // loop_header_branch
      %18 = sbr.rel (%p16) target = $region8
    $region5: #{tpu_custom_call.1} parent=1 // loop_body
      %s20 = ssub.s32 %s15, 1
      %s21 = ssub.s32 %s15, 2
      %s22 = sadd.s32 %s15, 1
      %s23 = ssub.s32 %s15, %s22
      %p24 = scmp.eq.s32.totalorder %s23, 0
      %s26 = sadd.s32 %s25, 1
      %s27 = scalar_select %p24, %s25, %s26
      %p30 = pneg %p24
      %p31 = scmp.eq.s32.totalorder %s15, 1
      %p32 = por %p30, %p31
      %p33 = scmp.ne.s32.totalorder %s25, %s28
      %p34 = scmp.eq.s32.totalorder %s15, 0
      %p35 = por %p33, %p34
      %p36 = scmp.ne.s32.totalorder %s25, %s28
      %p37 = scmp.eq.s32.totalorder %s20, 1
      %p38 = por %p36, %p37
      %p39 = scmp.ne.s32.totalorder %s28, %s29
      %p40 = scmp.eq.s32.totalorder %s20, 0
      %p41 = por %p39, %p40
      %p42 = scmp.ne.s32.totalorder %s28, %s29
      %p43 = scmp.eq.s32.totalorder %s21, 1
      %p44 = por %p42, %p43
      %p46 = scmp.ne.s32.totalorder %s29, %s45
      %p47 = scmp.eq.s32.totalorder %s21, 0
      %p48 = por %p46, %p47
      %s50 = sadd.s32 %s49, 1
      %p53 = scmp.eq.s32.totalorder %s15, 1
      %p54 = scmp.ne.s32.totalorder %s49, %s51
      %p55 = scmp.eq.s32.totalorder %s15, 0
      %p56 = por %p54, %p55
      %p57 = scmp.ne.s32.totalorder %s49, %s51
      %p58 = scmp.eq.s32.totalorder %s20, 1
      %p59 = por %p57, %p58
      %p60 = scmp.ne.s32.totalorder %s51, %s52
      %p61 = scmp.eq.s32.totalorder %s20, 0
      %p62 = por %p60, %p61
      %p63 = scmp.ne.s32.totalorder %s51, %s52
      %p64 = scmp.eq.s32.totalorder %s21, 1
      %p65 = por %p63, %p64
      %p67 = scmp.ne.s32.totalorder %s52, %s66
      %p68 = scmp.eq.s32.totalorder %s21, 0
      %p69 = por %p67, %p68
      %s70 = ssub.s32 %s15, %s22
      %p71 = scmp.eq.s32.totalorder %s70, 0
      %s73 = sadd.s32 %s72, 1
      %s74 = scalar_select %p71, %s72, %s73
      %p77 = pneg %p71
      %p78 = scmp.eq.s32.totalorder %s15, 1
      %p79 = por %p77, %p78
      %p80 = scmp.ne.s32.totalorder %s72, %s75
      %p81 = scmp.eq.s32.totalorder %s15, 0
      %p82 = por %p80, %p81
      %p83 = scmp.ne.s32.totalorder %s72, %s75
      %p84 = scmp.eq.s32.totalorder %s20, 1
      %p85 = por %p83, %p84
      %p86 = scmp.ne.s32.totalorder %s75, %s76
      %p87 = scmp.eq.s32.totalorder %s20, 0
      %p88 = por %p86, %p87
      %p89 = scmp.ne.s32.totalorder %s75, %s76
      %p90 = scmp.eq.s32.totalorder %s21, 1
      %p91 = por %p89, %p90
      %p93 = scmp.ne.s32.totalorder %s76, %s92
      %p94 = scmp.eq.s32.totalorder %s21, 0
      %p95 = por %p93, %p94
      %p96 = scmp.le.s32.totalorder 1, %s15
      %p97 = scmp.lt.s32.totalorder %s15, 3
      %p98 = pnand %p96, %p97
      %p99 = pneg %p98
      // Predicated region
      $region9: #{tpu_custom_call.1} parent=5 // pred_check
        _
      $region10: #{tpu_custom_call.1} parent=5 // pred_check_branch
        %101 = sbr.rel (%p98) target = $region12
      $region11: #{tpu_custom_call.1} parent=5 // pred_region
        %s102 = ssub.s32 %s15, 1
        // Predicated region
        $region13: #{tpu_custom_call.1} parent=11 // pred_check
          %p103 = pneg %p62
        $region14: #{tpu_custom_call.1} parent=11 // pred_check_branch
          %105 = sbr.rel (%p103) target = $region16
        $region15: #{tpu_custom_call.1} parent=11 // pred_region
          %s107 = ssub.s32 128, 128
          %108 = vsyncadd [#allocation6], %s107
          %s110 = sshll.u32 [#allocation5], 4
          %s111 = int_to_ptr.vmem [resolvable:$true] %s110
          %113 = dma.hbm_to_vmem [thread:$0]  %s1, 128, %s111, [#allocation6]
        $region16: #{tpu_custom_call.1} parent=11 // pred_fallthru
          _
      $region12: #{tpu_custom_call.1} parent=5 // pred_fallthru
        _
      %p114 = scmp.lt.s32.totalorder %s15, 2
      // Predicated region
      $region17: #{tpu_custom_call.1} parent=5 // pred_check
        %p115 = pneg %p114
      $region18: #{tpu_custom_call.1} parent=5 // pred_check_branch
        %117 = sbr.rel (%p115) target = $region20
      $region19: #{tpu_custom_call.1} parent=5 // pred_region
        // Predicated region
        $region21: #{tpu_custom_call.1} parent=19 // pred_check
          %p118 = pneg %p35
        $region22: #{tpu_custom_call.1} parent=19 // pred_check_branch
          %120 = sbr.rel (%p118) target = $region24
        $region23: #{tpu_custom_call.1} parent=19 // pred_region
          %s121 = sand.u32 %s25, 1
          %s122 = scalar_lea.sflag [#allocation3], %s121
          %s123 = sand.u32 %s25, 1
          %s124 = smul.addr %s123, 8
          %s125 = scalar_lea.vmem [#allocation2], %s124
          %s127 = ssub.s32 128, 128
          %128 = vsyncadd %s122, %s127
          %s129 = smul.addr %s15, 128
          %s130 = scalar_lea.hbm %s0, %s129
          %s132 = sshll.u32 %s125, 4
          %s133 = int_to_ptr.vmem [resolvable:$true] %s132
          %135 = dma.hbm_to_vmem [thread:$0]  %s130, 128, %s133, %s122
        $region24: #{tpu_custom_call.1} parent=19 // pred_fallthru
          _
      $region20: #{tpu_custom_call.1} parent=5 // pred_fallthru
        _
      %p136 = scmp.le.s32.totalorder 1, %s15
      %p137 = scmp.lt.s32.totalorder %s15, 3
      %p138 = pnand %p136, %p137
      %p139 = pneg %p138
      // Predicated region
      $region25: #{tpu_custom_call.1} parent=5 // pred_check
        _
      $region26: #{tpu_custom_call.1} parent=5 // pred_check_branch
        %141 = sbr.rel (%p138) target = $region28
      $region27: #{tpu_custom_call.1} parent=5 // pred_region
        %s142 = ssub.s32 %s15, 1
        %s143 = sand.u32 %s28, 1
        %s144 = scalar_lea.sflag [#allocation3], %s143
        %s145 = sand.u32 %s28, 1
        %s146 = smul.addr %s145, 8
        %s147 = scalar_lea.vmem [#allocation2], %s146
        // Predicated region
        $region29: #{tpu_custom_call.1} parent=27 // pred_check
          %p148 = pneg %p41
        $region30: #{tpu_custom_call.1} parent=27 // pred_check_branch
          %150 = sbr.rel (%p148) target = $region32
        $region31: #{tpu_custom_call.1} parent=27 // pred_region
          %151 = dma.done %s144, 128
        $region32: #{tpu_custom_call.1} parent=27 // pred_fallthru
          _
        // Predicated region
        $region33: #{tpu_custom_call.1} parent=27 // pred_check
          %p152 = pneg %p62
        $region34: #{tpu_custom_call.1} parent=27 // pred_check_branch
          %154 = sbr.rel (%p152) target = $region36
        $region35: #{tpu_custom_call.1} parent=27 // pred_region
          %155 = dma.done [#allocation6], 128
        $region36: #{tpu_custom_call.1} parent=27 // pred_fallthru
          _
        %s156 = sand.u32 %s28, 1
        %s157 = scalar_lea.sflag [#allocation3], %s156
        %s158 = sand.u32 %s28, 1
        %s159 = smul.addr %s158, 8
        %s160 = scalar_lea.vmem [#allocation2], %s159
        %p161 = pneg %p41
        %p162 = pneg %p38
        %p163 = pneg %p62
        %p164 = pneg %p59
        %p165 = pneg %p88
        %p166 = pneg %p85
        %s167 = sand.u32 %s75, 1
        %s168 = scalar_lea.sflag [#allocation4], %s167
        %s169 = sand.u32 %s75, 1
        %s170 = smul.addr %s169, 8
        %s171 = scalar_lea.vmem [#allocation7], %s170
        %v172 = vld [vmem:[%s147] sm:$0xff]
        %v173 = vld [vmem:[#allocation5] sm:$0xff]
        %v174 = vadd.f32 %v172, %v173
        %175 = vst [vmem:[%s171] sm:$0xff] %v174
        %s176 = sand.u32 %s75, 1
        %s177 = scalar_lea.sflag [#allocation4], %s176
        %s178 = sand.u32 %s75, 1
        %s179 = smul.addr %s178, 8
        %s180 = scalar_lea.vmem [#allocation7], %s179
        // Predicated region
        $region37: #{tpu_custom_call.1} parent=27 // pred_check
          %p181 = pneg %p85
        $region38: #{tpu_custom_call.1} parent=27 // pred_check_branch
          %183 = sbr.rel (%p181) target = $region40
        $region39: #{tpu_custom_call.1} parent=27 // pred_region
          %s185 = ssub.s32 128, 128
          %186 = vsyncadd %s177, %s185
          %s187 = smul.addr %s20, 128
          %s188 = scalar_lea.hbm %s2, %s187
          %s190 = sshll.u32 %s180, 4
          %s191 = int_to_ptr.vmem [resolvable:$true] %s190
          %193 = dma.vmem_to_hbm [thread:$0]  %s191, 128, %s188, %s177
        $region40: #{tpu_custom_call.1} parent=27 // pred_fallthru
          _
      $region28: #{tpu_custom_call.1} parent=5 // pred_fallthru
        _
      %p194 = scmp.le.s32.totalorder 2, %s15
      // Predicated region
      $region41: #{tpu_custom_call.1} parent=5 // pred_check
        %p195 = pneg %p194
      $region42: #{tpu_custom_call.1} parent=5 // pred_check_branch
        %197 = sbr.rel (%p195) target = $region44
      $region43: #{tpu_custom_call.1} parent=5 // pred_region
        %s198 = ssub.s32 %s15, 2
        // Predicated region
        $region45: #{tpu_custom_call.1} parent=43 // pred_check
          %p199 = pneg %p91
        $region46: #{tpu_custom_call.1} parent=43 // pred_check_branch
          %201 = sbr.rel (%p199) target = $region48
        $region47: #{tpu_custom_call.1} parent=43 // pred_region
          %s202 = sand.u32 %s76, 1
          %s203 = scalar_lea.sflag [#allocation4], %s202
          %s204 = sand.u32 %s76, 1
          %s205 = smul.addr %s204, 8
          %s206 = scalar_lea.vmem [#allocation7], %s205
          %207 = dma.done %s203, 128
        $region48: #{tpu_custom_call.1} parent=43 // pred_fallthru
          _
      $region44: #{tpu_custom_call.1} parent=5 // pred_fallthru
        _
    $region6: #{tpu_custom_call.1} parent=1 // loop_footer
      %s19 = sadd.s32 1, %s15
    $region7: #{tpu_custom_call.1} parent=1 // loop_footer_branch
      %14 = sbr.rel target = $region3
    $region8: #{tpu_custom_call.1} parent=1 // loop_exit
      _
    %208 = vsyncpa [#allocation3], 1
    %s209 = scalar_lea.sflag [#allocation3], 1
    %210 = vsyncpa %s209, 1
    %211 = vsyncpa [#allocation6], 1
    %212 = vsyncpa [#allocation4], 1
    %s213 = scalar_lea.sflag [#allocation4], 1
    %214 = vsyncpa %s213, 1

// kernel: tpu_custom_call.1
$region0: #{tpu_custom_call.1}
  #allocation0 [shape = 'u32[]', space=smem, size = 0x4, offset = 0x4, fixed_abs, tag = 'smem constant byte address 0x4 - core index']
  #allocation1 [shape = 'u32[144,128]{1,0:T(1,128)}', space=vmem, size = 0x12000, scoped, tag = 'internal scratch']
  %s0 = inlined_call_operand.hbm [shape: f32[128,128], index: 0, kind: input, shape index: {}]
  %s1 = inlined_call_operand.hbm [shape: bf16[128,512], index: 1, kind: input, shape index: {}]
  %s2 = inlined_call_operand.vmem [shape: f32[1,512], index: 2, kind: input, shape index: {}]
  %s3 = inlined_call_operand.hbm [shape: bf16[512,128], index: 3, kind: input, shape index: {}]
  %s4 = inlined_call_operand.vmem [shape: f32[1,128], index: 4, kind: input, shape index: {}]
  %s5 = inlined_call_operand.hbm [shape: f32[128,128], index: 5, kind: output, shape index: {}]
  %s6 = sld [smem:[#allocation0]]
  $region42: #{tpu_custom_call.1} parent=0
    _
  %s8 = ssub.s32 1, %s6
  %s9 = scalar_select 0, %s8, %s6
  $region1: #{tpu_custom_call.1} parent=0
    #allocation2 [shape = 'u8[65536]{0}', space=vmem, size = 0x10000, scoped, tag = 'input window, operand 0, single buffered']
    #allocation3 [shape = 's32[1]{0}', space=sflag, size = 0x4, scoped, tag = 'scoped memory for tpu_custom_call.1']
    #allocation4 [shape = 's32[1]{0}', space=sflag, size = 0x4, scoped, tag = 'scoped memory for tpu_custom_call.1']
    #allocation5 [shape = 'u8[131072]{0}', space=vmem, size = 0x20000, scoped, tag = 'input window, operand 1, single buffered']
    #allocation6 [shape = 's32[1]{0}', space=sflag, size = 0x4, scoped, tag = 'scoped memory for tpu_custom_call.1']
    #allocation7 [shape = 'u8[131072]{0}', space=vmem, size = 0x20000, scoped, tag = 'input window, operand 3, single buffered']
    #allocation8 [shape = 'u8[65536]{0}', space=vmem, size = 0x10000, scoped, tag = 'output window, operand 0, single buffered']
    %10 = vsyncpa [#allocation3], 0
    %11 = vsyncpa [#allocation6], 0
    %12 = vsyncpa [#allocation4], 0
    // Predicated region
    $region2: #{tpu_custom_call.1} parent=1 // pred_check
      _
    $region3: #{tpu_custom_call.1} parent=1 // pred_check_branch
      %14 = sbr.rel (0) target = $region5
    $region4: #{tpu_custom_call.1} parent=1 // pred_region
      %s16 = ssub.s32 2048, 2048
      %17 = vsyncadd [#allocation3], %s16
      %s18 = sshll.u32 [#allocation2], 4
      %s19 = int_to_ptr.vmem [resolvable:$true] %s18
      %24 = dma.hbm_to_vmem [thread:$0]  %s0, 2048, %s19, [#allocation3], 128, 128, 8
    $region5: #{tpu_custom_call.1} parent=1 // pred_fallthru
      _
    // Predicated region
    $region6: #{tpu_custom_call.1} parent=1 // pred_check
      _
    $region7: #{tpu_custom_call.1} parent=1 // pred_check_branch
      %26 = sbr.rel (0) target = $region9
    $region8: #{tpu_custom_call.1} parent=1 // pred_region
      %s28 = ssub.s32 4096, 4096
      %29 = vsyncadd [#allocation6], %s28
      %s30 = sshll.u32 [#allocation5], 4
      %s31 = int_to_ptr.vmem [resolvable:$true] %s30
      %36 = dma.hbm_to_vmem [thread:$0]  %s1, 4096, %s31, [#allocation6], 256, 256, 16
    $region9: #{tpu_custom_call.1} parent=1 // pred_fallthru
      _
    // Predicated region
    $region10: #{tpu_custom_call.1} parent=1 // pred_check
      _
    $region11: #{tpu_custom_call.1} parent=1 // pred_check_branch
      %38 = sbr.rel (0) target = $region13
    $region12: #{tpu_custom_call.1} parent=1 // pred_region
      _
    $region13: #{tpu_custom_call.1} parent=1 // pred_fallthru
      _
    // Predicated region
    $region14: #{tpu_custom_call.1} parent=1 // pred_check
      _
    $region15: #{tpu_custom_call.1} parent=1 // pred_check_branch
      %40 = sbr.rel (0) target = $region17
    $region16: #{tpu_custom_call.1} parent=1 // pred_region
      %s42 = ssub.s32 4096, 4096
      %43 = vsyncadd [#allocation6], %s42
      %s44 = sshll.u32 [#allocation7], 4
      %s45 = int_to_ptr.vmem [resolvable:$true] %s44
      %50 = dma.hbm_to_vmem [thread:$0]  %s3, 4096, %s45, [#allocation6], 64, 64, 4
    $region17: #{tpu_custom_call.1} parent=1 // pred_fallthru
      _
    // Predicated region
    $region18: #{tpu_custom_call.1} parent=1 // pred_check
      _
    $region19: #{tpu_custom_call.1} parent=1 // pred_check_branch
      %52 = sbr.rel (0) target = $region21
    $region20: #{tpu_custom_call.1} parent=1 // pred_region
      _
    $region21: #{tpu_custom_call.1} parent=1 // pred_fallthru
      _
    // Predicated region
    $region22: #{tpu_custom_call.1} parent=1 // pred_check
      _
    $region23: #{tpu_custom_call.1} parent=1 // pred_check_branch
      %54 = sbr.rel (0) target = $region25
    $region24: #{tpu_custom_call.1} parent=1 // pred_region
      %55 = dma.done [#allocation3], 2048
    $region25: #{tpu_custom_call.1} parent=1 // pred_fallthru
      _
    // Predicated region
    $region26: #{tpu_custom_call.1} parent=1 // pred_check
      _
    $region27: #{tpu_custom_call.1} parent=1 // pred_check_branch
      %57 = sbr.rel (0) target = $region29
    $region28: #{tpu_custom_call.1} parent=1 // pred_region
      %58 = dma.done [#allocation6], 4096
    $region29: #{tpu_custom_call.1} parent=1 // pred_fallthru
      _
    // Predicated region
    $region30: #{tpu_custom_call.1} parent=1 // pred_check
      _
    $region31: #{tpu_custom_call.1} parent=1 // pred_check_branch
      %60 = sbr.rel (0) target = $region33
    $region32: #{tpu_custom_call.1} parent=1 // pred_region
      %61 = dma.done [#allocation6], 4096
    $region33: #{tpu_custom_call.1} parent=1 // pred_fallthru
      _
    %v67 = vld [vmem:[#allocation2] sm:$0xff]
    %v68 = vld [vmem:[#allocation2 + $0x8] sm:$0xff]
    %v69 = vld [vmem:[#allocation2 + $0x10] sm:$0xff]
    %v70 = vld [vmem:[#allocation2 + $0x18] sm:$0xff]
    %v71 = vld [vmem:[#allocation2 + $0x20] sm:$0xff]
    %v72 = vld [vmem:[#allocation2 + $0x28] sm:$0xff]
    %v73 = vld [vmem:[#allocation2 + $0x30] sm:$0xff]
    %v74 = vld [vmem:[#allocation2 + $0x38] sm:$0xff]
    %v75 = vld [vmem:[#allocation2 + $0x40] sm:$0xff]
    %v76 = vld [vmem:[#allocation2 + $0x48] sm:$0xff]
    %v77 = vld [vmem:[#allocation2 + $0x50] sm:$0xff]
    %v78 = vld [vmem:[#allocation2 + $0x58] sm:$0xff]
    %v79 = vld [vmem:[#allocation2 + $0x60] sm:$0xff]
    %v80 = vld [vmem:[#allocation2 + $0x68] sm:$0xff]
    %v81 = vld [vmem:[#allocation2 + $0x70] sm:$0xff]
    %v82 = vld [vmem:[#allocation2 + $0x78] sm:$0xff]
    %v83 = vpack.c.bf16 %v68, %v67
    %v84 = vpack.c.bf16 %v70, %v69
    %v85 = vpack.c.bf16 %v72, %v71
    %v86 = vpack.c.bf16 %v74, %v73
    %v87 = vpack.c.bf16 %v76, %v75
    %v88 = vpack.c.bf16 %v78, %v77
    %v89 = vpack.c.bf16 %v80, %v79
    %v90 = vpack.c.bf16 %v82, %v81
    %v91 = vld [vmem:[#allocation5] sm:$0xff]
    %v92 = vld [vmem:[#allocation5 + $0x8] sm:$0xff]
    %v93 = vld [vmem:[#allocation5 + $0x10] sm:$0xff]
    %v94 = vld [vmem:[#allocation5 + $0x18] sm:$0xff]
    %v95 = vld [vmem:[#allocation5 + $0x20] sm:$0xff]
    %v96 = vld [vmem:[#allocation5 + $0x28] sm:$0xff]
    %v97 = vld [vmem:[#allocation5 + $0x30] sm:$0xff]
    %v98 = vld [vmem:[#allocation5 + $0x38] sm:$0xff]
    %v99 = vld [vmem:[#allocation5 + $0x40] sm:$0xff]
    %v100 = vld [vmem:[#allocation5 + $0x48] sm:$0xff]
    %v101 = vld [vmem:[#allocation5 + $0x50] sm:$0xff]
    %v102 = vld [vmem:[#allocation5 + $0x58] sm:$0xff]
    %v103 = vld [vmem:[#allocation5 + $0x60] sm:$0xff]
    %v104 = vld [vmem:[#allocation5 + $0x68] sm:$0xff]
    %v105 = vld [vmem:[#allocation5 + $0x70] sm:$0xff]
    %v106 = vld [vmem:[#allocation5 + $0x78] sm:$0xff]
    %v107 = vld [vmem:[#allocation5 + $0x80] sm:$0xff]
    %v108 = vld [vmem:[#allocation5 + $0x88] sm:$0xff]
    %v109 = vld [vmem:[#allocation5 + $0x90] sm:$0xff]
    %v110 = vld [vmem:[#allocation5 + $0x98] sm:$0xff]
    %v111 = vld [vmem:[#allocation5 + $0xa0] sm:$0xff]
    %v112 = vld [vmem:[#allocation5 + $0xa8] sm:$0xff]
    %v113 = vld [vmem:[#allocation5 + $0xb0] sm:$0xff]
    %v114 = vld [vmem:[#allocation5 + $0xb8] sm:$0xff]
    %v115 = vld [vmem:[#allocation5 + $0xc0] sm:$0xff]
    %v116 = vld [vmem:[#allocation5 + $0xc8] sm:$0xff]
    %v117 = vld [vmem:[#allocation5 + $0xd0] sm:$0xff]
    %v118 = vld [vmem:[#allocation5 + $0xd8] sm:$0xff]
    %v119 = vld [vmem:[#allocation5 + $0xe0] sm:$0xff]
    %v120 = vld [vmem:[#allocation5 + $0xe8] sm:$0xff]
    %v121 = vld [vmem:[#allocation5 + $0xf0] sm:$0xff]
    %v122 = vld [vmem:[#allocation5 + $0xf8] sm:$0xff]
    %v123 = vld [vmem:[%s2] sm:$0xf]
    %v125 = vlaneseq
    %v126 = vshrl.u32 %v125, 7
    %v127 = vsub.s32 0, %v126
    %v128 = vrot.slane %v123, %v127
    %v129 = vlaneseq
    %v130 = vshrl.u32 %v129, 7
    %v131 = vsub.s32 1, %v130
    %v132 = vrot.slane %v123, %v131
    %v133 = vlaneseq
    %v134 = vshrl.u32 %v133, 7
    %v135 = vsub.s32 2, %v134
    %v136 = vrot.slane %v123, %v135
    %v137 = vlaneseq
    %v138 = vshrl.u32 %v137, 7
    %v139 = vsub.s32 3, %v138
    %v140 = vrot.slane %v123, %v139
    %v177 = vunpack.c.l.b16 %v91
    %v178 = vunpack.c.h.b16 %v91
    %v179 = vunpack.c.l.b16 %v92
    %v180 = vunpack.c.h.b16 %v92
    %v181 = vunpack.c.l.b16 %v93
    %v182 = vunpack.c.h.b16 %v93
    %v183 = vunpack.c.l.b16 %v94
    %v184 = vunpack.c.h.b16 %v94
    %v185 = vunpack.c.l.b16 %v95
    %v186 = vunpack.c.h.b16 %v95
    %v187 = vunpack.c.l.b16 %v96
    %v188 = vunpack.c.h.b16 %v96
    %v189 = vunpack.c.l.b16 %v97
    %v190 = vunpack.c.h.b16 %v97
    %v191 = vunpack.c.l.b16 %v98
    %v192 = vunpack.c.h.b16 %v98
    %v193 = vunpack.c.l.b16 %v99
    %v194 = vunpack.c.h.b16 %v99
    %v195 = vunpack.c.l.b16 %v100
    %v196 = vunpack.c.h.b16 %v100
    %v197 = vunpack.c.l.b16 %v101
    %v198 = vunpack.c.h.b16 %v101
    %v199 = vunpack.c.l.b16 %v102
    %v200 = vunpack.c.h.b16 %v102
    %v201 = vunpack.c.l.b16 %v103
    %v202 = vunpack.c.h.b16 %v103
    %v203 = vunpack.c.l.b16 %v104
    %v204 = vunpack.c.h.b16 %v104
    %v205 = vunpack.c.l.b16 %v105
    %v206 = vunpack.c.h.b16 %v105
    %v207 = vunpack.c.l.b16 %v106
    %v208 = vunpack.c.h.b16 %v106
    %v209 = vunpack.c.l.b16 %v107
    %v210 = vunpack.c.h.b16 %v107
    %v211 = vunpack.c.l.b16 %v108
    %v212 = vunpack.c.h.b16 %v108
    %v213 = vunpack.c.l.b16 %v109
    %v214 = vunpack.c.h.b16 %v109
    %v215 = vunpack.c.l.b16 %v110
    %v216 = vunpack.c.h.b16 %v110
    %v217 = vunpack.c.l.b16 %v111
    %v218 = vunpack.c.h.b16 %v111
    %v219 = vunpack.c.l.b16 %v112
    %v220 = vunpack.c.h.b16 %v112
    %v221 = vunpack.c.l.b16 %v113
    %v222 = vunpack.c.h.b16 %v113
    %v223 = vunpack.c.l.b16 %v114
    %v224 = vunpack.c.h.b16 %v114
    %v225 = vunpack.c.l.b16 %v115
    %v226 = vunpack.c.h.b16 %v115
    %v227 = vunpack.c.l.b16 %v116
    %v228 = vunpack.c.h.b16 %v116
    %v229 = vunpack.c.l.b16 %v117
    %v230 = vunpack.c.h.b16 %v117
    %v231 = vunpack.c.l.b16 %v118
    %v232 = vunpack.c.h.b16 %v118
    %v233 = vunpack.c.l.b16 %v119
    %v234 = vunpack.c.h.b16 %v119
    %v235 = vunpack.c.l.b16 %v120
    %v236 = vunpack.c.h.b16 %v120
    %v237 = vunpack.c.l.b16 %v121
    %v238 = vunpack.c.h.b16 %v121
    %v239 = vunpack.c.l.b16 %v122
    %v240 = vunpack.c.h.b16 %v122
    %v241 = vpack.c.b16 %v181, %v177
    %v242 = vpack.c.b16 %v182, %v178
    %v243 = vpack.c.b16 %v183, %v179
    %v244 = vpack.c.b16 %v184, %v180
    %v245 = vpack.c.b16 %v189, %v185
    %v246 = vpack.c.b16 %v190, %v186
    %v247 = vpack.c.b16 %v191, %v187
    %v248 = vpack.c.b16 %v192, %v188
    %v249 = vpack.c.b16 %v197, %v193
    %v250 = vpack.c.b16 %v198, %v194
    %v251 = vpack.c.b16 %v199, %v195
    %v252 = vpack.c.b16 %v200, %v196
    %v253 = vpack.c.b16 %v205, %v201
    %v254 = vpack.c.b16 %v206, %v202
    %v255 = vpack.c.b16 %v207, %v203
    %v256 = vpack.c.b16 %v208, %v204
    %v257 = vpack.c.b16 %v213, %v209
    %v258 = vpack.c.b16 %v214, %v210
    %v259 = vpack.c.b16 %v215, %v211
    %v260 = vpack.c.b16 %v216, %v212
    %v261 = vpack.c.b16 %v221, %v217
    %v262 = vpack.c.b16 %v222, %v218
    %v263 = vpack.c.b16 %v223, %v219
    %v264 = vpack.c.b16 %v224, %v220
    %v265 = vpack.c.b16 %v229, %v225
    %v266 = vpack.c.b16 %v230, %v226
    %v267 = vpack.c.b16 %v231, %v227
    %v268 = vpack.c.b16 %v232, %v228
    %v269 = vpack.c.b16 %v237, %v233
    %v270 = vpack.c.b16 %v238, %v234
    %v271 = vpack.c.b16 %v239, %v235
    %v272 = vpack.c.b16 %v240, %v236
    %305 = vmatprep.subr.bf16.mxu0 %v242
    %306 = vmatpush1.bf16.msra.mxu0 %v241
    %307 = vmatprep.subr.bf16.mxu0 %v246
    %308 = vmatpush1.bf16.msra.mxu0 %v245
    %309 = vmatprep.subr.bf16.mxu0 %v250
    %310 = vmatpush1.bf16.msra.mxu0 %v249
    %311 = vmatprep.subr.bf16.mxu0 %v254
    %312 = vmatpush1.bf16.msra.mxu0 %v253
    %313 = vmatprep.subr.bf16.mxu0 %v258
    %314 = vmatpush1.bf16.msra.mxu0 %v257
    %315 = vmatprep.subr.bf16.mxu0 %v262
    %316 = vmatpush1.bf16.msra.mxu0 %v261
    %317 = vmatprep.subr.bf16.mxu0 %v266
    %318 = vmatpush1.bf16.msra.mxu0 %v265
    %319 = vmatprep.subr.bf16.mxu0 %v270
    %320 = vmatpush1.bf16.msra.mxu0 %v269
    %321 = vmatprep.subr.bf16.mxu0 0
    %322 = vmatpush1.bf16.msra.mxu0 0
    %323 = vmatprep.subr.bf16.mxu0 0
    %324 = vmatpush1.bf16.msra.mxu0 0
    %325 = vmatprep.subr.bf16.mxu0 0
    %326 = vmatpush1.bf16.msra.mxu0 0
    %327 = vmatprep.subr.bf16.mxu0 0
    %328 = vmatpush1.bf16.msra.mxu0 0
    %329 = vmatprep.subr.bf16.mxu0 0
    %330 = vmatpush1.bf16.msra.mxu0 0
    %331 = vmatprep.subr.bf16.mxu0 0
    %332 = vmatpush1.bf16.msra.mxu0 0
    %333 = vmatprep.subr.bf16.mxu0 0
    %334 = vmatpush1.bf16.msra.mxu0 0
    %335 = vmatprep.subr.bf16.mxu0 0
    %336 = vmatpush1.bf16.msra.mxu0 0
    %337 = vmatprep.mubr.bf16.mxu0 0
    %338 = vmatmul.mubr.bf16.gmra.mrb[0].mxu0 %v83
    %v339 = vpop.f32.mrb[0].mxu0
    %v340 = vadd.f32 %v128, %v339
    %v341 = vpop.f32.mrb[0].mxu0
    %v342 = vadd.f32 %v132, %v341
    %v343 = vpop.f32.mrb[0].mxu0
    %v344 = vadd.f32 %v128, %v343
    %v345 = vpop.f32.mrb[0].mxu0
    %v346 = vadd.f32 %v132, %v345
    %347 = vmatprep.mubr.bf16.mxu0 0
    %348 = vmatmul.mubr.bf16.gmra.mrb[0].mxu0 %v84
    %v349 = vpop.f32.mrb[0].mxu0
    %v350 = vadd.f32 %v128, %v349
    %v351 = vpop.f32.mrb[0].mxu0
    %v352 = vadd.f32 %v132, %v351
    %v353 = vpop.f32.mrb[0].mxu0
    %v354 = vadd.f32 %v128, %v353
    %v355 = vpop.f32.mrb[0].mxu0
    %v356 = vadd.f32 %v132, %v355
    %357 = vmatprep.mubr.bf16.mxu0 0
    %358 = vmatmul.mubr.bf16.gmra.mrb[0].mxu0 %v85
    %v359 = vpop.f32.mrb[0].mxu0
    %v360 = vadd.f32 %v128, %v359
    %v361 = vpop.f32.mrb[0].mxu0
    %v362 = vadd.f32 %v132, %v361
    %v363 = vpop.f32.mrb[0].mxu0
    %v364 = vadd.f32 %v128, %v363
    %v365 = vpop.f32.mrb[0].mxu0
    %v366 = vadd.f32 %v132, %v365
    %367 = vmatprep.mubr.bf16.mxu0 0
    %368 = vmatmul.mubr.bf16.gmra.mrb[0].mxu0 %v86
    %v369 = vpop.f32.mrb[0].mxu0
    %v370 = vadd.f32 %v128, %v369
    %v371 = vpop.f32.mrb[0].mxu0
    %v372 = vadd.f32 %v132, %v371
    %v373 = vpop.f32.mrb[0].mxu0
    %v374 = vadd.f32 %v128, %v373
    %v375 = vpop.f32.mrb[0].mxu0
    %v376 = vadd.f32 %v132, %v375
    %377 = vmatprep.mubr.bf16.mxu0 0
    %378 = vmatmul.mubr.bf16.gmra.mrb[0].mxu0 %v87
    %v379 = vpop.f32.mrb[0].mxu0
    %v380 = vadd.f32 %v128, %v379
    %v381 = vpop.f32.mrb[0].mxu0
    %v382 = vadd.f32 %v132, %v381
    %v383 = vpop.f32.mrb[0].mxu0
    %v384 = vadd.f32 %v128, %v383
    %v385 = vpop.f32.mrb[0].mxu0
    %v386 = vadd.f32 %v132, %v385
    %387 = vmatprep.mubr.bf16.mxu0 0
    %388 = vmatmul.mubr.bf16.gmra.mrb[0].mxu0 %v88
    %v389 = vpop.f32.mrb[0].mxu0
    %v390 = vadd.f32 %v128, %v389
    %v391 = vpop.f32.mrb[0].mxu0
    %v392 = vadd.f32 %v132, %v391
    %v393 = vpop.f32.mrb[0].mxu0
    %v394 = vadd.f32 %v128, %v393
    %v395 = vpop.f32.mrb[0].mxu0
    %v396 = vadd.f32 %v132, %v395
    %397 = vmatprep.mubr.bf16.mxu0 0
    %398 = vmatmul.mubr.bf16.gmra.mrb[0].mxu0 %v89
    %v399 = vpop.f32.mrb[0].mxu0
    %v400 = vadd.f32 %v128, %v399
    %v401 = vpop.f32.mrb[0].mxu0
    %v402 = vadd.f32 %v132, %v401
    %v403 = vpop.f32.mrb[0].mxu0
    %v404 = vadd.f32 %v128, %v403
    %v405 = vpop.f32.mrb[0].mxu0
    %v406 = vadd.f32 %v132, %v405
    %407 = vmatprep.mubr.bf16.mxu0 0
    %408 = vmatmul.mubr.bf16.gmra.mrb[0].mxu0 %v90
    %v409 = vpop.f32.mrb[0].mxu0
    %v410 = vadd.f32 %v128, %v409
    %v411 = vpop.f32.mrb[0].mxu0
    %v412 = vadd.f32 %v132, %v411
    %v413 = vpop.f32.mrb[0].mxu0
    %v414 = vadd.f32 %v128, %v413
    %v415 = vpop.f32.mrb[0].mxu0
    %v416 = vadd.f32 %v132, %v415
    %417 = vdwg.mxu0
    %418 = vmatprep.subr.bf16.mxu0 %v244
    %419 = vmatpush1.bf16.msra.mxu0 %v243
    %420 = vmatprep.subr.bf16.mxu0 %v248
    %421 = vmatpush1.bf16.msra.mxu0 %v247
    %422 = vmatprep.subr.bf16.mxu0 %v252
    %423 = vmatpush1.bf16.msra.mxu0 %v251
    %424 = vmatprep.subr.bf16.mxu0 %v256
    %425 = vmatpush1.bf16.msra.mxu0 %v255
    %426 = vmatprep.subr.bf16.mxu0 %v260
    %427 = vmatpush1.bf16.msra.mxu0 %v259
    %428 = vmatprep.subr.bf16.mxu0 %v264
    %429 = vmatpush1.bf16.msra.mxu0 %v263
    %430 = vmatprep.subr.bf16.mxu0 %v268
    %431 = vmatpush1.bf16.msra.mxu0 %v267
    %432 = vmatprep.subr.bf16.mxu0 %v272
    %433 = vmatpush1.bf16.msra.mxu0 %v271
    %434 = vmatprep.subr.bf16.mxu0 0
    %435 = vmatpush1.bf16.msra.mxu0 0
    %436 = vmatprep.subr.bf16.mxu0 0
    %437 = vmatpush1.bf16.msra.mxu0 0
    %438 = vmatprep.subr.bf16.mxu0 0
    %439 = vmatpush1.bf16.msra.mxu0 0
    %440 = vmatprep.subr.bf16.mxu0 0
    %441 = vmatpush1.bf16.msra.mxu0 0
    %442 = vmatprep.subr.bf16.mxu0 0
    %443 = vmatpush1.bf16.msra.mxu0 0
    %444 = vmatprep.subr.bf16.mxu0 0
    %445 = vmatpush1.bf16.msra.mxu0 0
    %446 = vmatprep.subr.bf16.mxu0 0
    %447 = vmatpush1.bf16.msra.mxu0 0
    %448 = vmatprep.subr.bf16.mxu0 0
    %449 = vmatpush1.bf16.msra.mxu0 0
    %450 = vmatprep.mubr.bf16.mxu0 0
    %451 = vmatmul.mubr.bf16.gmra.mrb[0].mxu0 %v83
    %v452 = vpop.f32.mrb[0].mxu0
    %v453 = vadd.f32 %v136, %v452
    %v454 = vpop.f32.mrb[0].mxu0
    %v455 = vadd.f32 %v140, %v454
    %v456 = vpop.f32.mrb[0].mxu0
    %v457 = vadd.f32 %v136, %v456
    %v458 = vpop.f32.mrb[0].mxu0
    %v459 = vadd.f32 %v140, %v458
    %460 = vmatprep.mubr.bf16.mxu0 0
    %461 = vmatmul.mubr.bf16.gmra.mrb[0].mxu0 %v84
    %v462 = vpop.f32.mrb[0].mxu0
    %v463 = vadd.f32 %v136, %v462
    %v464 = vpop.f32.mrb[0].mxu0
    %v465 = vadd.f32 %v140, %v464
    %v466 = vpop.f32.mrb[0].mxu0
    %v467 = vadd.f32 %v136, %v466
    %v468 = vpop.f32.mrb[0].mxu0
    %v469 = vadd.f32 %v140, %v468
    %470 = vmatprep.mubr.bf16.mxu0 0
    %471 = vmatmul.mubr.bf16.gmra.mrb[0].mxu0 %v85
    %v472 = vpop.f32.mrb[0].mxu0
    %v473 = vadd.f32 %v136, %v472
    %v474 = vpop.f32.mrb[0].mxu0
    %v475 = vadd.f32 %v140, %v474
    %v476 = vpop.f32.mrb[0].mxu0
    %v477 = vadd.f32 %v136, %v476
    %v478 = vpop.f32.mrb[0].mxu0
    %v479 = vadd.f32 %v140, %v478
    %480 = vmatprep.mubr.bf16.mxu0 0
    %481 = vmatmul.mubr.bf16.gmra.mrb[0].mxu0 %v86
    %v482 = vpop.f32.mrb[0].mxu0
    %v483 = vadd.f32 %v136, %v482
    %v484 = vpop.f32.mrb[0].mxu0
    %v485 = vadd.f32 %v140, %v484
    %v486 = vpop.f32.mrb[0].mxu0
    %v487 = vadd.f32 %v136, %v486
    %v488 = vpop.f32.mrb[0].mxu0
    %v489 = vadd.f32 %v140, %v488
    %490 = vmatprep.mubr.bf16.mxu0 0
    %491 = vmatmul.mubr.bf16.gmra.mrb[0].mxu0 %v87
    %v492 = vpop.f32.mrb[0].mxu0
    %v493 = vadd.f32 %v136, %v492
    %v494 = vpop.f32.mrb[0].mxu0
    %v495 = vadd.f32 %v140, %v494
    %v496 = vpop.f32.mrb[0].mxu0
    %v497 = vadd.f32 %v136, %v496
    %v498 = vpop.f32.mrb[0].mxu0
    %v499 = vadd.f32 %v140, %v498
    %500 = vmatprep.mubr.bf16.mxu0 0
    %501 = vmatmul.mubr.bf16.gmra.mrb[0].mxu0 %v88
    %v502 = vpop.f32.mrb[0].mxu0
    %v503 = vadd.f32 %v136, %v502
    %v504 = vpop.f32.mrb[0].mxu0
    %v505 = vadd.f32 %v140, %v504
    %v506 = vpop.f32.mrb[0].mxu0
    %v507 = vadd.f32 %v136, %v506
    %v508 = vpop.f32.mrb[0].mxu0
    %v509 = vadd.f32 %v140, %v508
    %510 = vmatprep.mubr.bf16.mxu0 0
    %511 = vmatmul.mubr.bf16.gmra.mrb[0].mxu0 %v89
    %v512 = vpop.f32.mrb[0].mxu0
    %v513 = vadd.f32 %v136, %v512
    %v514 = vpop.f32.mrb[0].mxu0
    %v515 = vadd.f32 %v140, %v514
    %v516 = vpop.f32.mrb[0].mxu0
    %v517 = vadd.f32 %v136, %v516
    %v518 = vpop.f32.mrb[0].mxu0
    %v519 = vadd.f32 %v140, %v518
    %520 = vmatprep.mubr.bf16.mxu0 0
    %521 = vmatmul.mubr.bf16.gmra.mrb[0].mxu0 %v90
    %v522 = vpop.f32.mrb[0].mxu0
    %v523 = vadd.f32 %v136, %v522
    %v524 = vpop.f32.mrb[0].mxu0
    %v525 = vadd.f32 %v140, %v524
    %v526 = vpop.f32.mrb[0].mxu0
    %v527 = vadd.f32 %v136, %v526
    %v528 = vpop.f32.mrb[0].mxu0
    %v529 = vadd.f32 %v140, %v528
    %530 = vdwg.mxu0
    %v531 = vpack.c.bf16 %v344, %v340
    %v532 = vpack.c.bf16 %v346, %v342
    %v533 = vpack.c.bf16 %v457, %v453
    %v534 = vpack.c.bf16 %v459, %v455
    %v535 = vpack.c.bf16 %v354, %v350
    %v536 = vpack.c.bf16 %v356, %v352
    %v537 = vpack.c.bf16 %v467, %v463
    %v538 = vpack.c.bf16 %v469, %v465
    %v539 = vpack.c.bf16 %v364, %v360
    %v540 = vpack.c.bf16 %v366, %v362
    %v541 = vpack.c.bf16 %v477, %v473
    %v542 = vpack.c.bf16 %v479, %v475
    %v543 = vpack.c.bf16 %v374, %v370
    %v544 = vpack.c.bf16 %v376, %v372
    %v545 = vpack.c.bf16 %v487, %v483
    %v546 = vpack.c.bf16 %v489, %v485
    %v547 = vpack.c.bf16 %v384, %v380
    %v548 = vpack.c.bf16 %v386, %v382
    %v549 = vpack.c.bf16 %v497, %v493
    %v550 = vpack.c.bf16 %v499, %v495
    %v551 = vpack.c.bf16 %v394, %v390
    %v552 = vpack.c.bf16 %v396, %v392
    %v553 = vpack.c.bf16 %v507, %v503
    %v554 = vpack.c.bf16 %v509, %v505
    %v555 = vpack.c.bf16 %v404, %v400
    %v556 = vpack.c.bf16 %v406, %v402
    %v557 = vpack.c.bf16 %v517, %v513
    %v558 = vpack.c.bf16 %v519, %v515
    %v559 = vpack.c.bf16 %v414, %v410
    %v560 = vpack.c.bf16 %v416, %v412
    %v561 = vpack.c.bf16 %v527, %v523
    %v562 = vpack.c.bf16 %v529, %v525
    %v563 = vmul.bf16 %v531, %v531
    %v564 = vmul.bf16 %v532, %v532
    %v565 = vmul.bf16 %v533, %v533
    %v566 = vmul.bf16 %v534, %v534
    %v567 = vmul.bf16 %v535, %v535
    %v568 = vmul.bf16 %v536, %v536
    %v569 = vmul.bf16 %v537, %v537
    %v570 = vmul.bf16 %v538, %v538
    %v571 = vmul.bf16 %v539, %v539
    %v572 = vmul.bf16 %v540, %v540
    %v573 = vmul.bf16 %v541, %v541
    %v574 = vmul.bf16 %v542, %v542
    %v575 = vmul.bf16 %v543, %v543
    %v576 = vmul.bf16 %v544, %v544
    %v577 = vmul.bf16 %v545, %v545
    %v578 = vmul.bf16 %v546, %v546
    %v579 = vmul.bf16 %v547, %v547
    %v580 = vmul.bf16 %v548, %v548
    %v581 = vmul.bf16 %v549, %v549
    %v582 = vmul.bf16 %v550, %v550
    %v583 = vmul.bf16 %v551, %v551
    %v584 = vmul.bf16 %v552, %v552
    %v585 = vmul.bf16 %v553, %v553
    %v586 = vmul.bf16 %v554, %v554
    %v587 = vmul.bf16 %v555, %v555
    %v588 = vmul.bf16 %v556, %v556
    %v589 = vmul.bf16 %v557, %v557
    %v590 = vmul.bf16 %v558, %v558
    %v591 = vmul.bf16 %v559, %v559
    %v592 = vmul.bf16 %v560, %v560
    %v593 = vmul.bf16 %v561, %v561
    %v594 = vmul.bf16 %v562, %v562
    %v595 = vmul.bf16 %v563, %v531
    %v596 = vmul.bf16 %v564, %v532
    %v597 = vmul.bf16 %v565, %v533
    %v598 = vmul.bf16 %v566, %v534
    %v599 = vmul.bf16 %v567, %v535
    %v600 = vmul.bf16 %v568, %v536
    %v601 = vmul.bf16 %v569, %v537
    %v602 = vmul.bf16 %v570, %v538
    %v603 = vmul.bf16 %v571, %v539
    %v604 = vmul.bf16 %v572, %v540
    %v605 = vmul.bf16 %v573, %v541
    %v606 = vmul.bf16 %v574, %v542
    %v607 = vmul.bf16 %v575, %v543
    %v608 = vmul.bf16 %v576, %v544
    %v609 = vmul.bf16 %v577, %v545
    %v610 = vmul.bf16 %v578, %v546
    %v611 = vmul.bf16 %v579, %v547
    %v612 = vmul.bf16 %v580, %v548
    %v613 = vmul.bf16 %v581, %v549
    %v614 = vmul.bf16 %v582, %v550
    %v615 = vmul.bf16 %v583, %v551
    %v616 = vmul.bf16 %v584, %v552
    %v617 = vmul.bf16 %v585, %v553
    %v618 = vmul.bf16 %v586, %v554
    %v619 = vmul.bf16 %v587, %v555
    %v620 = vmul.bf16 %v588, %v556
    %v621 = vmul.bf16 %v589, %v557
    %v622 = vmul.bf16 %v590, %v558
    %v623 = vmul.bf16 %v591, %v559
    %v624 = vmul.bf16 %v592, %v560
    %v625 = vmul.bf16 %v593, %v561
    %v626 = vmul.bf16 %v594, %v562
    %v627 = vmul.bf16 %v531, 1056980736
    %v628 = vmul.bf16 %v532, 1056980736
    %v629 = vmul.bf16 %v533, 1056980736
    %v630 = vmul.bf16 %v534, 1056980736
    %v631 = vmul.bf16 %v535, 1056980736
    %v632 = vmul.bf16 %v536, 1056980736
    %v633 = vmul.bf16 %v537, 1056980736
    %v634 = vmul.bf16 %v538, 1056980736
    %v635 = vmul.bf16 %v539, 1056980736
    %v636 = vmul.bf16 %v540, 1056980736
    %v637 = vmul.bf16 %v541, 1056980736
    %v638 = vmul.bf16 %v542, 1056980736
    %v639 = vmul.bf16 %v543, 1056980736
    %v640 = vmul.bf16 %v544, 1056980736
    %v641 = vmul.bf16 %v545, 1056980736
    %v642 = vmul.bf16 %v546, 1056980736
    %v643 = vmul.bf16 %v547, 1056980736
    %v644 = vmul.bf16 %v548, 1056980736
    %v645 = vmul.bf16 %v549, 1056980736
    %v646 = vmul.bf16 %v550, 1056980736
    %v647 = vmul.bf16 %v551, 1056980736
    %v648 = vmul.bf16 %v552, 1056980736
    %v649 = vmul.bf16 %v553, 1056980736
    %v650 = vmul.bf16 %v554, 1056980736
    %v651 = vmul.bf16 %v555, 1056980736
    %v652 = vmul.bf16 %v556, 1056980736
    %v653 = vmul.bf16 %v557, 1056980736
    %v654 = vmul.bf16 %v558, 1056980736
    %v655 = vmul.bf16 %v559, 1056980736
    %v656 = vmul.bf16 %v560, 1056980736
    %v657 = vmul.bf16 %v561, 1056980736
    %v658 = vmul.bf16 %v562, 1056980736
    %v659 = vmul.bf16 %v595, 1027030327
    %v660 = vmul.bf16 %v596, 1027030327
    %v661 = vmul.bf16 %v597, 1027030327
    %v662 = vmul.bf16 %v598, 1027030327
    %v663 = vmul.bf16 %v599, 1027030327
    %v664 = vmul.bf16 %v600, 1027030327
    %v665 = vmul.bf16 %v601, 1027030327
    %v666 = vmul.bf16 %v602, 1027030327
    %v667 = vmul.bf16 %v603, 1027030327
    %v668 = vmul.bf16 %v604, 1027030327
    %v669 = vmul.bf16 %v605, 1027030327
    %v670 = vmul.bf16 %v606, 1027030327
    %v671 = vmul.bf16 %v607, 1027030327
    %v672 = vmul.bf16 %v608, 1027030327
    %v673 = vmul.bf16 %v609, 1027030327
    %v674 = vmul.bf16 %v610, 1027030327
    %v675 = vmul.bf16 %v611, 1027030327
    %v676 = vmul.bf16 %v612, 1027030327
    %v677 = vmul.bf16 %v613, 1027030327
    %v678 = vmul.bf16 %v614, 1027030327
    %v679 = vmul.bf16 %v615, 1027030327
    %v680 = vmul.bf16 %v616, 1027030327
    %v681 = vmul.bf16 %v617, 1027030327
    %v682 = vmul.bf16 %v618, 1027030327
    %v683 = vmul.bf16 %v619, 1027030327
    %v684 = vmul.bf16 %v620, 1027030327
    %v685 = vmul.bf16 %v621, 1027030327
    %v686 = vmul.bf16 %v622, 1027030327
    %v687 = vmul.bf16 %v623, 1027030327
    %v688 = vmul.bf16 %v624, 1027030327
    %v689 = vmul.bf16 %v625, 1027030327
    %v690 = vmul.bf16 %v626, 1027030327
    %v691 = vadd.bf16 %v531, %v659
    %v692 = vadd.bf16 %v532, %v660
    %v693 = vadd.bf16 %v533, %v661
    %v694 = vadd.bf16 %v534, %v662
    %v695 = vadd.bf16 %v535, %v663
    %v696 = vadd.bf16 %v536, %v664
    %v697 = vadd.bf16 %v537, %v665
    %v698 = vadd.bf16 %v538, %v666
    %v699 = vadd.bf16 %v539, %v667
    %v700 = vadd.bf16 %v540, %v668
    %v701 = vadd.bf16 %v541, %v669
    %v702 = vadd.bf16 %v542, %v670
    %v703 = vadd.bf16 %v543, %v671
    %v704 = vadd.bf16 %v544, %v672
    %v705 = vadd.bf16 %v545, %v673
    %v706 = vadd.bf16 %v546, %v674
    %v707 = vadd.bf16 %v547, %v675
    %v708 = vadd.bf16 %v548, %v676
    %v709 = vadd.bf16 %v549, %v677
    %v710 = vadd.bf16 %v550, %v678
    %v711 = vadd.bf16 %v551, %v679
    %v712 = vadd.bf16 %v552, %v680
    %v713 = vadd.bf16 %v553, %v681
    %v714 = vadd.bf16 %v554, %v682
    %v715 = vadd.bf16 %v555, %v683
    %v716 = vadd.bf16 %v556, %v684
    %v717 = vadd.bf16 %v557, %v685
    %v718 = vadd.bf16 %v558, %v686
    %v719 = vadd.bf16 %v559, %v687
    %v720 = vadd.bf16 %v560, %v688
    %v721 = vadd.bf16 %v561, %v689
    %v722 = vadd.bf16 %v562, %v690
    %v723 = vmul.bf16 %v691, 1061961548
    %v724 = vmul.bf16 %v692, 1061961548
    %v725 = vmul.bf16 %v693, 1061961548
    %v726 = vmul.bf16 %v694, 1061961548
    %v727 = vmul.bf16 %v695, 1061961548
    %v728 = vmul.bf16 %v696, 1061961548
    %v729 = vmul.bf16 %v697, 1061961548
    %v730 = vmul.bf16 %v698, 1061961548
    %v731 = vmul.bf16 %v699, 1061961548
    %v732 = vmul.bf16 %v700, 1061961548
    %v733 = vmul.bf16 %v701, 1061961548
    %v734 = vmul.bf16 %v702, 1061961548
    %v735 = vmul.bf16 %v703, 1061961548
    %v736 = vmul.bf16 %v704, 1061961548
    %v737 = vmul.bf16 %v705, 1061961548
    %v738 = vmul.bf16 %v706, 1061961548
    %v739 = vmul.bf16 %v707, 1061961548
    %v740 = vmul.bf16 %v708, 1061961548
    %v741 = vmul.bf16 %v709, 1061961548
    %v742 = vmul.bf16 %v710, 1061961548
    %v743 = vmul.bf16 %v711, 1061961548
    %v744 = vmul.bf16 %v712, 1061961548
    %v745 = vmul.bf16 %v713, 1061961548
    %v746 = vmul.bf16 %v714, 1061961548
    %v747 = vmul.bf16 %v715, 1061961548
    %v748 = vmul.bf16 %v716, 1061961548
    %v749 = vmul.bf16 %v717, 1061961548
    %v750 = vmul.bf16 %v718, 1061961548
    %v751 = vmul.bf16 %v719, 1061961548
    %v752 = vmul.bf16 %v720, 1061961548
    %v753 = vmul.bf16 %v721, 1061961548
    %v754 = vmul.bf16 %v722, 1061961548
    %v755 = vtanh.bf16.pop %v723
    %v756 = vtanh.bf16.pop %v724
    %v757 = vtanh.bf16.pop %v725
    %v758 = vtanh.bf16.pop %v726
    %v759 = vtanh.bf16.pop %v727
    %v760 = vtanh.bf16.pop %v728
    %v761 = vtanh.bf16.pop %v729
    %v762 = vtanh.bf16.pop %v730
    %v763 = vtanh.bf16.pop %v731
    %v764 = vtanh.bf16.pop %v732
    %v765 = vtanh.bf16.pop %v733
    %v766 = vtanh.bf16.pop %v734
    %v767 = vtanh.bf16.pop %v735
    %v768 = vtanh.bf16.pop %v736
    %v769 = vtanh.bf16.pop %v737
    %v770 = vtanh.bf16.pop %v738
    %v771 = vtanh.bf16.pop %v739
    %v772 = vtanh.bf16.pop %v740
    %v773 = vtanh.bf16.pop %v741
    %v774 = vtanh.bf16.pop %v742
    %v775 = vtanh.bf16.pop %v743
    %v776 = vtanh.bf16.pop %v744
    %v777 = vtanh.bf16.pop %v745
    %v778 = vtanh.bf16.pop %v746
    %v779 = vtanh.bf16.pop %v747
    %v780 = vtanh.bf16.pop %v748
    %v781 = vtanh.bf16.pop %v749
    %v782 = vtanh.bf16.pop %v750
    %v783 = vtanh.bf16.pop %v751
    %v784 = vtanh.bf16.pop %v752
    %v785 = vtanh.bf16.pop %v753
    %v786 = vtanh.bf16.pop %v754
    %v787 = vadd.bf16 %v755, 1065369472
    %v788 = vadd.bf16 %v756, 1065369472
    %v789 = vadd.bf16 %v757, 1065369472
    %v790 = vadd.bf16 %v758, 1065369472
    %v791 = vadd.bf16 %v759, 1065369472
    %v792 = vadd.bf16 %v760, 1065369472
    %v793 = vadd.bf16 %v761, 1065369472
    %v794 = vadd.bf16 %v762, 1065369472
    %v795 = vadd.bf16 %v763, 1065369472
    %v796 = vadd.bf16 %v764, 1065369472
    %v797 = vadd.bf16 %v765, 1065369472
    %v798 = vadd.bf16 %v766, 1065369472
    %v799 = vadd.bf16 %v767, 1065369472
    %v800 = vadd.bf16 %v768, 1065369472
    %v801 = vadd.bf16 %v769, 1065369472
    %v802 = vadd.bf16 %v770, 1065369472
    %v803 = vadd.bf16 %v771, 1065369472
    %v804 = vadd.bf16 %v772, 1065369472
    %v805 = vadd.bf16 %v773, 1065369472
    %v806 = vadd.bf16 %v774, 1065369472
    %v807 = vadd.bf16 %v775, 1065369472
    %v808 = vadd.bf16 %v776, 1065369472
    %v809 = vadd.bf16 %v777, 1065369472
    %v810 = vadd.bf16 %v778, 1065369472
    %v811 = vadd.bf16 %v779, 1065369472
    %v812 = vadd.bf16 %v780, 1065369472
    %v813 = vadd.bf16 %v781, 1065369472
    %v814 = vadd.bf16 %v782, 1065369472
    %v815 = vadd.bf16 %v783, 1065369472
    %v816 = vadd.bf16 %v784, 1065369472
    %v817 = vadd.bf16 %v785, 1065369472
    %v818 = vadd.bf16 %v786, 1065369472
    %v819 = vmul.bf16 %v627, %v787
    %v820 = vmul.bf16 %v628, %v788
    %v821 = vmul.bf16 %v629, %v789
    %v822 = vmul.bf16 %v630, %v790
    %v823 = vmul.bf16 %v631, %v791
    %v824 = vmul.bf16 %v632, %v792
    %v825 = vmul.bf16 %v633, %v793
    %v826 = vmul.bf16 %v634, %v794
    %v827 = vmul.bf16 %v635, %v795
    %v828 = vmul.bf16 %v636, %v796
    %v829 = vmul.bf16 %v637, %v797
    %v830 = vmul.bf16 %v638, %v798
    %v831 = vmul.bf16 %v639, %v799
    %v832 = vmul.bf16 %v640, %v800
    %v833 = vmul.bf16 %v641, %v801
    %v834 = vmul.bf16 %v642, %v802
    %v835 = vmul.bf16 %v643, %v803
    %v836 = vmul.bf16 %v644, %v804
    %v837 = vmul.bf16 %v645, %v805
    %v838 = vmul.bf16 %v646, %v806
    %v839 = vmul.bf16 %v647, %v807
    %v840 = vmul.bf16 %v648, %v808
    %v841 = vmul.bf16 %v649, %v809
    %v842 = vmul.bf16 %v650, %v810
    %v843 = vmul.bf16 %v651, %v811
    %v844 = vmul.bf16 %v652, %v812
    %v845 = vmul.bf16 %v653, %v813
    %v846 = vmul.bf16 %v654, %v814
    %v847 = vmul.bf16 %v655, %v815
    %v848 = vmul.bf16 %v656, %v816
    %v849 = vmul.bf16 %v657, %v817
    %v850 = vmul.bf16 %v658, %v818
    %v851 = vld [vmem:[#allocation7] sm:$0xf]
    %v852 = vld [vmem:[#allocation7 + $0x4] sm:$0xf]
    %v853 = vld [vmem:[#allocation7 + $0x8] sm:$0xf]
    %v854 = vld [vmem:[#allocation7 + $0xc] sm:$0xf]
    %v855 = vld [vmem:[#allocation7 + $0x10] sm:$0xf]
    %v856 = vld [vmem:[#allocation7 + $0x14] sm:$0xf]
    %v857 = vld [vmem:[#allocation7 + $0x18] sm:$0xf]
    %v858 = vld [vmem:[#allocation7 + $0x1c] sm:$0xf]
    %v859 = vld [vmem:[#allocation7 + $0x20] sm:$0xf]
    %v860 = vld [vmem:[#allocation7 + $0x24] sm:$0xf]
    %v861 = vld [vmem:[#allocation7 + $0x28] sm:$0xf]
    %v862 = vld [vmem:[#allocation7 + $0x2c] sm:$0xf]
    %v863 = vld [vmem:[#allocation7 + $0x30] sm:$0xf]
    %v864 = vld [vmem:[#allocation7 + $0x34] sm:$0xf]
    %v865 = vld [vmem:[#allocation7 + $0x38] sm:$0xf]
    %v866 = vld [vmem:[#allocation7 + $0x3c] sm:$0xf]
    %v867 = vld [vmem:[#allocation7 + $0x40] sm:$0xf]
    %v868 = vld [vmem:[#allocation7 + $0x44] sm:$0xf]
    %v869 = vld [vmem:[#allocation7 + $0x48] sm:$0xf]
    %v870 = vld [vmem:[#allocation7 + $0x4c] sm:$0xf]
    %v871 = vld [vmem:[#allocation7 + $0x50] sm:$0xf]
    %v872 = vld [vmem:[#allocation7 + $0x54] sm:$0xf]
    %v873 = vld [vmem:[#allocation7 + $0x58] sm:$0xf]
    %v874 = vld [vmem:[#allocation7 + $0x5c] sm:$0xf]
    %v875 = vld [vmem:[#allocation7 + $0x60] sm:$0xf]
    %v876 = vld [vmem:[#allocation7 + $0x64] sm:$0xf]
    %v877 = vld [vmem:[#allocation7 + $0x68] sm:$0xf]
    %v878 = vld [vmem:[#allocation7 + $0x6c] sm:$0xf]
    %v879 = vld [vmem:[#allocation7 + $0x70] sm:$0xf]
    %v880 = vld [vmem:[#allocation7 + $0x74] sm:$0xf]
    %v881 = vld [vmem:[#allocation7 + $0x78] sm:$0xf]
    %v882 = vld [vmem:[#allocation7 + $0x7c] sm:$0xf]
    %v883 = vld [vmem:[#allocation7 + $0x80] sm:$0xf]
    %v884 = vld [vmem:[#allocation7 + $0x84] sm:$0xf]
    %v885 = vld [vmem:[#allocation7 + $0x88] sm:$0xf]
    %v886 = vld [vmem:[#allocation7 + $0x8c] sm:$0xf]
    %v887 = vld [vmem:[#allocation7 + $0x90] sm:$0xf]
    %v888 = vld [vmem:[#allocation7 + $0x94] sm:$0xf]
    %v889 = vld [vmem:[#allocation7 + $0x98] sm:$0xf]
    %v890 = vld [vmem:[#allocation7 + $0x9c] sm:$0xf]
    %v891 = vld [vmem:[#allocation7 + $0xa0] sm:$0xf]
    %v892 = vld [vmem:[#allocation7 + $0xa4] sm:$0xf]
    %v893 = vld [vmem:[#allocation7 + $0xa8] sm:$0xf]
    %v894 = vld [vmem:[#allocation7 + $0xac] sm:$0xf]
    %v895 = vld [vmem:[#allocation7 + $0xb0] sm:$0xf]
    %v896 = vld [vmem:[#allocation7 + $0xb4] sm:$0xf]
    %v897 = vld [vmem:[#allocation7 + $0xb8] sm:$0xf]
    %v898 = vld [vmem:[#allocation7 + $0xbc] sm:$0xf]
    %v899 = vld [vmem:[#allocation7 + $0xc0] sm:$0xf]
    %v900 = vld [vmem:[#allocation7 + $0xc4] sm:$0xf]
    %v901 = vld [vmem:[#allocation7 + $0xc8] sm:$0xf]
    %v902 = vld [vmem:[#allocation7 + $0xcc] sm:$0xf]
    %v903 = vld [vmem:[#allocation7 + $0xd0] sm:$0xf]
    %v904 = vld [vmem:[#allocation7 + $0xd4] sm:$0xf]
    %v905 = vld [vmem:[#allocation7 + $0xd8] sm:$0xf]
    %v906 = vld [vmem:[#allocation7 + $0xdc] sm:$0xf]
    %v907 = vld [vmem:[#allocation7 + $0xe0] sm:$0xf]
    %v908 = vld [vmem:[#allocation7 + $0xe4] sm:$0xf]
    %v909 = vld [vmem:[#allocation7 + $0xe8] sm:$0xf]
    %v910 = vld [vmem:[#allocation7 + $0xec] sm:$0xf]
    %v911 = vld [vmem:[#allocation7 + $0xf0] sm:$0xf]
    %v912 = vld [vmem:[#allocation7 + $0xf4] sm:$0xf]
    %v913 = vld [vmem:[#allocation7 + $0xf8] sm:$0xf]
    %v914 = vld [vmem:[#allocation7 + $0xfc] sm:$0xf]
    %v915 = vld [vmem:[%s4] sm:$0x1]
    %v917 = vlaneseq
    %v918 = vshrl.u32 %v917, 7
    %v919 = vsub.s32 0, %v918
    %v920 = vrot.slane %v915, %v919
    %v986 = vunpack.c.l.b16 %v851
    %v987 = vunpack.c.l.b16 %v852
    %v988 = vunpack.c.l.b16 %v853
    %v989 = vunpack.c.l.b16 %v854
    %v990 = vunpack.c.l.b16 %v855
    %v991 = vunpack.c.l.b16 %v856
    %v992 = vunpack.c.l.b16 %v857
    %v993 = vunpack.c.l.b16 %v858
    %v994 = vunpack.c.l.b16 %v859
    %v995 = vunpack.c.l.b16 %v860
    %v996 = vunpack.c.l.b16 %v861
    %v997 = vunpack.c.l.b16 %v862
    %v998 = vunpack.c.l.b16 %v863
    %v999 = vunpack.c.l.b16 %v864
    %v1000 = vunpack.c.l.b16 %v865
    %v1001 = vunpack.c.l.b16 %v866
    %v1002 = vunpack.c.l.b16 %v867
    %v1003 = vunpack.c.l.b16 %v868
    %v1004 = vunpack.c.l.b16 %v869
    %v1005 = vunpack.c.l.b16 %v870
    %v1006 = vunpack.c.l.b16 %v871
    %v1007 = vunpack.c.l.b16 %v872
    %v1008 = vunpack.c.l.b16 %v873
    %v1009 = vunpack.c.l.b16 %v874
    %v1010 = vunpack.c.l.b16 %v875
    %v1011 = vunpack.c.l.b16 %v876
    %v1012 = vunpack.c.l.b16 %v877
    %v1013 = vunpack.c.l.b16 %v878
    %v1014 = vunpack.c.l.b16 %v879
    %v1015 = vunpack.c.l.b16 %v880
    %v1016 = vunpack.c.l.b16 %v881
    %v1017 = vunpack.c.l.b16 %v882
    %v1018 = vunpack.c.l.b16 %v883
    %v1019 = vunpack.c.l.b16 %v884
    %v1020 = vunpack.c.l.b16 %v885
    %v1021 = vunpack.c.l.b16 %v886
    %v1022 = vunpack.c.l.b16 %v887
    %v1023 = vunpack.c.l.b16 %v888
    %v1024 = vunpack.c.l.b16 %v889
    %v1025 = vunpack.c.l.b16 %v890
    %v1026 = vunpack.c.l.b16 %v891
    %v1027 = vunpack.c.l.b16 %v892
    %v1028 = vunpack.c.l.b16 %v893
    %v1029 = vunpack.c.l.b16 %v894
    %v1030 = vunpack.c.l.b16 %v895
    %v1031 = vunpack.c.l.b16 %v896
    %v1032 = vunpack.c.l.b16 %v897
    %v1033 = vunpack.c.l.b16 %v898
    %v1034 = vunpack.c.l.b16 %v899
    %v1035 = vunpack.c.l.b16 %v900
    %v1036 = vunpack.c.l.b16 %v901
    %v1037 = vunpack.c.l.b16 %v902
    %v1038 = vunpack.c.l.b16 %v903
    %v1039 = vunpack.c.l.b16 %v904
    %v1040 = vunpack.c.l.b16 %v905
    %v1041 = vunpack.c.l.b16 %v906
    %v1042 = vunpack.c.l.b16 %v907
    %v1043 = vunpack.c.l.b16 %v908
    %v1044 = vunpack.c.l.b16 %v909
    %v1045 = vunpack.c.l.b16 %v910
    %v1046 = vunpack.c.l.b16 %v911
    %v1047 = vunpack.c.l.b16 %v912
    %v1048 = vunpack.c.l.b16 %v913
    %v1049 = vunpack.c.l.b16 %v914
    %v1050 = vpack.c.b16 %v987, %v986
    %v1051 = vpack.c.b16 %v989, %v988
    %v1052 = vpack.c.b16 %v991, %v990
    %v1053 = vpack.c.b16 %v993, %v992
    %v1054 = vpack.c.b16 %v995, %v994
    %v1055 = vpack.c.b16 %v997, %v996
    %v1056 = vpack.c.b16 %v999, %v998
    %v1057 = vpack.c.b16 %v1001, %v1000
    %v1058 = vpack.c.b16 %v1003, %v1002
    %v1059 = vpack.c.b16 %v1005, %v1004
    %v1060 = vpack.c.b16 %v1007, %v1006
    %v1061 = vpack.c.b16 %v1009, %v1008
    %v1062 = vpack.c.b16 %v1011, %v1010
    %v1063 = vpack.c.b16 %v1013, %v1012
    %v1064 = vpack.c.b16 %v1015, %v1014
    %v1065 = vpack.c.b16 %v1017, %v1016
    %v1066 = vpack.c.b16 %v1019, %v1018
    %v1067 = vpack.c.b16 %v1021, %v1020
    %v1068 = vpack.c.b16 %v1023, %v1022
    %v1069 = vpack.c.b16 %v1025, %v1024
    %v1070 = vpack.c.b16 %v1027, %v1026
    %v1071 = vpack.c.b16 %v1029, %v1028
    %v1072 = vpack.c.b16 %v1031, %v1030
    %v1073 = vpack.c.b16 %v1033, %v1032
    %v1074 = vpack.c.b16 %v1035, %v1034
    %v1075 = vpack.c.b16 %v1037, %v1036
    %v1076 = vpack.c.b16 %v1039, %v1038
    %v1077 = vpack.c.b16 %v1041, %v1040
    %v1078 = vpack.c.b16 %v1043, %v1042
    %v1079 = vpack.c.b16 %v1045, %v1044
    %v1080 = vpack.c.b16 %v1047, %v1046
    %v1081 = vpack.c.b16 %v1049, %v1048
    %1114 = vmatprep.subr.bf16.mxu0 0
    %1115 = vmatpush1.bf16.msra.mxu0 %v1050
    %1116 = vmatprep.subr.bf16.mxu0 0
    %1117 = vmatpush1.bf16.msra.mxu0 %v1051
    %1118 = vmatprep.subr.bf16.mxu0 0
    %1119 = vmatpush1.bf16.msra.mxu0 %v1052
    %1120 = vmatprep.subr.bf16.mxu0 0
    %1121 = vmatpush1.bf16.msra.mxu0 %v1053
    %1122 = vmatprep.subr.bf16.mxu0 0
    %1123 = vmatpush1.bf16.msra.mxu0 %v1054
    %1124 = vmatprep.subr.bf16.mxu0 0
    %1125 = vmatpush1.bf16.msra.mxu0 %v1055
    %1126 = vmatprep.subr.bf16.mxu0 0
    %1127 = vmatpush1.bf16.msra.mxu0 %v1056
    %1128 = vmatprep.subr.bf16.mxu0 0
    %1129 = vmatpush1.bf16.msra.mxu0 %v1057
    %1130 = vmatprep.subr.bf16.mxu0 0
    %1131 = vmatpush1.bf16.msra.mxu0 %v1058
    %1132 = vmatprep.subr.bf16.mxu0 0
    %1133 = vmatpush1.bf16.msra.mxu0 %v1059
    %1134 = vmatprep.subr.bf16.mxu0 0
    %1135 = vmatpush1.bf16.msra.mxu0 %v1060
    %1136 = vmatprep.subr.bf16.mxu0 0
    %1137 = vmatpush1.bf16.msra.mxu0 %v1061
    %1138 = vmatprep.subr.bf16.mxu0 0
    %1139 = vmatpush1.bf16.msra.mxu0 %v1062
    %1140 = vmatprep.subr.bf16.mxu0 0
    %1141 = vmatpush1.bf16.msra.mxu0 %v1063
    %1142 = vmatprep.subr.bf16.mxu0 0
    %1143 = vmatpush1.bf16.msra.mxu0 %v1064
    %1144 = vmatprep.subr.bf16.mxu0 0
    %1145 = vmatpush1.bf16.msra.mxu0 %v1065
    %1146 = vmatprep.mubr.bf16.mxu0 %v820
    %1147 = vmatmul.mubr.bf16.gmra.mrb[0].mxu0 %v819
    %v1148 = vpop.f32.mrb[0].mxu0
    %v1149 = vadd.f32 %v920, %v1148
    %v1150 = vpop.f32.mrb[0].mxu0
    %v1151 = vpop.f32.mrb[0].mxu0
    %v1152 = vadd.f32 %v920, %v1151
    %v1153 = vpop.f32.mrb[0].mxu0
    %1154 = vmatprep.mubr.bf16.mxu0 %v824
    %1155 = vmatmul.mubr.bf16.gmra.mrb[0].mxu0 %v823
    %v1156 = vpop.f32.mrb[0].mxu0
    %v1157 = vadd.f32 %v920, %v1156
    %v1158 = vpop.f32.mrb[0].mxu0
    %v1159 = vpop.f32.mrb[0].mxu0
    %v1160 = vadd.f32 %v920, %v1159
    %v1161 = vpop.f32.mrb[0].mxu0
    %1162 = vmatprep.mubr.bf16.mxu0 %v828
    %1163 = vmatmul.mubr.bf16.gmra.mrb[0].mxu0 %v827
    %v1164 = vpop.f32.mrb[0].mxu0
    %v1165 = vadd.f32 %v920, %v1164
    %v1166 = vpop.f32.mrb[0].mxu0
    %v1167 = vpop.f32.mrb[0].mxu0
    %v1168 = vadd.f32 %v920, %v1167
    %v1169 = vpop.f32.mrb[0].mxu0
    %1170 = vmatprep.mubr.bf16.mxu0 %v832
    %1171 = vmatmul.mubr.bf16.gmra.mrb[0].mxu0 %v831
    %v1172 = vpop.f32.mrb[0].mxu0
    %v1173 = vadd.f32 %v920, %v1172
    %v1174 = vpop.f32.mrb[0].mxu0
    %v1175 = vpop.f32.mrb[0].mxu0
    %v1176 = vadd.f32 %v920, %v1175
    %v1177 = vpop.f32.mrb[0].mxu0
    %1178 = vmatprep.mubr.bf16.mxu0 %v836
    %1179 = vmatmul.mubr.bf16.gmra.mrb[0].mxu0 %v835
    %v1180 = vpop.f32.mrb[0].mxu0
    %v1181 = vadd.f32 %v920, %v1180
    %v1182 = vpop.f32.mrb[0].mxu0
    %v1183 = vpop.f32.mrb[0].mxu0
    %v1184 = vadd.f32 %v920, %v1183
    %v1185 = vpop.f32.mrb[0].mxu0
    %1186 = vmatprep.mubr.bf16.mxu0 %v840
    %1187 = vmatmul.mubr.bf16.gmra.mrb[0].mxu0 %v839
    %v1188 = vpop.f32.mrb[0].mxu0
    %v1189 = vadd.f32 %v920, %v1188
    %v1190 = vpop.f32.mrb[0].mxu0
    %v1191 = vpop.f32.mrb[0].mxu0
    %v1192 = vadd.f32 %v920, %v1191
    %v1193 = vpop.f32.mrb[0].mxu0
    %1194 = vmatprep.mubr.bf16.mxu0 %v844
    %1195 = vmatmul.mubr.bf16.gmra.mrb[0].mxu0 %v843
    %v1196 = vpop.f32.mrb[0].mxu0
    %v1197 = vadd.f32 %v920, %v1196
    %v1198 = vpop.f32.mrb[0].mxu0
    %v1199 = vpop.f32.mrb[0].mxu0
    %v1200 = vadd.f32 %v920, %v1199
    %v1201 = vpop.f32.mrb[0].mxu0
    %1202 = vmatprep.mubr.bf16.mxu0 %v848
    %1203 = vmatmul.mubr.bf16.gmra.mrb[0].mxu0 %v847
    %v1204 = vpop.f32.mrb[0].mxu0
    %v1205 = vadd.f32 %v920, %v1204
    %v1206 = vpop.f32.mrb[0].mxu0
    %v1207 = vpop.f32.mrb[0].mxu0
    %v1208 = vadd.f32 %v920, %v1207
    %v1209 = vpop.f32.mrb[0].mxu0
    %1210 = vdwg.mxu0
    %1211 = vmatprep.subr.bf16.mxu0 0
    %1212 = vmatpush1.bf16.msra.mxu0 %v1066
    %1213 = vmatprep.subr.bf16.mxu0 0
    %1214 = vmatpush1.bf16.msra.mxu0 %v1067
    %1215 = vmatprep.subr.bf16.mxu0 0
    %1216 = vmatpush1.bf16.msra.mxu0 %v1068
    %1217 = vmatprep.subr.bf16.mxu0 0
    %1218 = vmatpush1.bf16.msra.mxu0 %v1069
    %1219 = vmatprep.subr.bf16.mxu0 0
    %1220 = vmatpush1.bf16.msra.mxu0 %v1070
    %1221 = vmatprep.subr.bf16.mxu0 0
    %1222 = vmatpush1.bf16.msra.mxu0 %v1071
    %1223 = vmatprep.subr.bf16.mxu0 0
    %1224 = vmatpush1.bf16.msra.mxu0 %v1072
    %1225 = vmatprep.subr.bf16.mxu0 0
    %1226 = vmatpush1.bf16.msra.mxu0 %v1073
    %1227 = vmatprep.subr.bf16.mxu0 0
    %1228 = vmatpush1.bf16.msra.mxu0 %v1074
    %1229 = vmatprep.subr.bf16.mxu0 0
    %1230 = vmatpush1.bf16.msra.mxu0 %v1075
    %1231 = vmatprep.subr.bf16.mxu0 0
    %1232 = vmatpush1.bf16.msra.mxu0 %v1076
    %1233 = vmatprep.subr.bf16.mxu0 0
    %1234 = vmatpush1.bf16.msra.mxu0 %v1077
    %1235 = vmatprep.subr.bf16.mxu0 0
    %1236 = vmatpush1.bf16.msra.mxu0 %v1078
    %1237 = vmatprep.subr.bf16.mxu0 0
    %1238 = vmatpush1.bf16.msra.mxu0 %v1079
    %1239 = vmatprep.subr.bf16.mxu0 0
    %1240 = vmatpush1.bf16.msra.mxu0 %v1080
    %1241 = vmatprep.subr.bf16.mxu0 0
    %1242 = vmatpush1.bf16.msra.mxu0 %v1081
    %1243 = vmatprep.mubr.bf16.mxu0 %v822
    %1244 = vmatmul.mubr.bf16.gmra.mrb[0].mxu0 %v821
    %v1245 = vpop.f32.mrb[0].mxu0
    %v1246 = vadd.f32 %v1149, %v1245
    %v1247 = vpop.f32.mrb[0].mxu0
    %v1248 = vpop.f32.mrb[0].mxu0
    %v1249 = vadd.f32 %v1152, %v1248
    %v1250 = vpop.f32.mrb[0].mxu0
    %1251 = vmatprep.mubr.bf16.mxu0 %v826
    %1252 = vmatmul.mubr.bf16.gmra.mrb[0].mxu0 %v825
    %v1253 = vpop.f32.mrb[0].mxu0
    %v1254 = vadd.f32 %v1157, %v1253
    %v1255 = vpop.f32.mrb[0].mxu0
    %v1256 = vpop.f32.mrb[0].mxu0
    %v1257 = vadd.f32 %v1160, %v1256
    %v1258 = vpop.f32.mrb[0].mxu0
    %1259 = vmatprep.mubr.bf16.mxu0 %v830
    %1260 = vmatmul.mubr.bf16.gmra.mrb[0].mxu0 %v829
    %v1261 = vpop.f32.mrb[0].mxu0
    %v1262 = vadd.f32 %v1165, %v1261
    %v1263 = vpop.f32.mrb[0].mxu0
    %v1264 = vpop.f32.mrb[0].mxu0
    %v1265 = vadd.f32 %v1168, %v1264
    %v1266 = vpop.f32.mrb[0].mxu0
    %1267 = vmatprep.mubr.bf16.mxu0 %v834
    %1268 = vmatmul.mubr.bf16.gmra.mrb[0].mxu0 %v833
    %v1269 = vpop.f32.mrb[0].mxu0
    %v1270 = vadd.f32 %v1173, %v1269
    %v1271 = vpop.f32.mrb[0].mxu0
    %v1272 = vpop.f32.mrb[0].mxu0
    %v1273 = vadd.f32 %v1176, %v1272
    %v1274 = vpop.f32.mrb[0].mxu0
    %1275 = vmatprep.mubr.bf16.mxu0 %v838
    %1276 = vmatmul.mubr.bf16.gmra.mrb[0].mxu0 %v837
    %v1277 = vpop.f32.mrb[0].mxu0
    %v1278 = vadd.f32 %v1181, %v1277
    %v1279 = vpop.f32.mrb[0].mxu0
    %v1280 = vpop.f32.mrb[0].mxu0
    %v1281 = vadd.f32 %v1184, %v1280
    %v1282 = vpop.f32.mrb[0].mxu0
    %1283 = vmatprep.mubr.bf16.mxu0 %v842
    %1284 = vmatmul.mubr.bf16.gmra.mrb[0].mxu0 %v841
    %v1285 = vpop.f32.mrb[0].mxu0
    %v1286 = vadd.f32 %v1189, %v1285
    %v1287 = vpop.f32.mrb[0].mxu0
    %v1288 = vpop.f32.mrb[0].mxu0
    %v1289 = vadd.f32 %v1192, %v1288
    %v1290 = vpop.f32.mrb[0].mxu0
    %1291 = vmatprep.mubr.bf16.mxu0 %v846
    %1292 = vmatmul.mubr.bf16.gmra.mrb[0].mxu0 %v845
    %v1293 = vpop.f32.mrb[0].mxu0
    %v1294 = vadd.f32 %v1197, %v1293
    %v1295 = vpop.f32.mrb[0].mxu0
    %v1296 = vpop.f32.mrb[0].mxu0
    %v1297 = vadd.f32 %v1200, %v1296
    %v1298 = vpop.f32.mrb[0].mxu0
    %1299 = vmatprep.mubr.bf16.mxu0 %v850
    %1300 = vmatmul.mubr.bf16.gmra.mrb[0].mxu0 %v849
    %v1301 = vpop.f32.mrb[0].mxu0
    %v1302 = vadd.f32 %v1205, %v1301
    %v1303 = vpop.f32.mrb[0].mxu0
    %v1304 = vpop.f32.mrb[0].mxu0
    %v1305 = vadd.f32 %v1208, %v1304
    %v1306 = vpop.f32.mrb[0].mxu0
    %1307 = vdwg.mxu0
    %1308 = vst [vmem:[#allocation8] sm:$0xff] %v1246
    %1309 = vst [vmem:[#allocation8 + $0x8] sm:$0xff] %v1249
    %1310 = vst [vmem:[#allocation8 + $0x10] sm:$0xff] %v1254
    %1311 = vst [vmem:[#allocation8 + $0x18] sm:$0xff] %v1257
    %1312 = vst [vmem:[#allocation8 + $0x20] sm:$0xff] %v1262
    %1313 = vst [vmem:[#allocation8 + $0x28] sm:$0xff] %v1265
    %1314 = vst [vmem:[#allocation8 + $0x30] sm:$0xff] %v1270
    %1315 = vst [vmem:[#allocation8 + $0x38] sm:$0xff] %v1273
    %1316 = vst [vmem:[#allocation8 + $0x40] sm:$0xff] %v1278
    %1317 = vst [vmem:[#allocation8 + $0x48] sm:$0xff] %v1281
    %1318 = vst [vmem:[#allocation8 + $0x50] sm:$0xff] %v1286
    %1319 = vst [vmem:[#allocation8 + $0x58] sm:$0xff] %v1289
    %1320 = vst [vmem:[#allocation8 + $0x60] sm:$0xff] %v1294
    %1321 = vst [vmem:[#allocation8 + $0x68] sm:$0xff] %v1297
    %1322 = vst [vmem:[#allocation8 + $0x70] sm:$0xff] %v1302
    %1323 = vst [vmem:[#allocation8 + $0x78] sm:$0xff] %v1305
    // Predicated region
    $region34: #{tpu_custom_call.1} parent=1 // pred_check
      _
    $region35: #{tpu_custom_call.1} parent=1 // pred_check_branch
      %1325 = sbr.rel (0) target = $region37
    $region36: #{tpu_custom_call.1} parent=1 // pred_region
      %s1327 = ssub.s32 2048, 2048
      %1328 = vsyncadd [#allocation4], %s1327
      %s1329 = sshll.u32 [#allocation8], 4
      %s1330 = int_to_ptr.vmem [resolvable:$true] %s1329
      %1335 = dma.vmem_to_hbm [thread:$0]  %s1330, 2048, %s5, [#allocation4], 128, 128, 8
    $region37: #{tpu_custom_call.1} parent=1 // pred_fallthru
      _
    // Predicated region
    $region38: #{tpu_custom_call.1} parent=1 // pred_check
      _
    $region39: #{tpu_custom_call.1} parent=1 // pred_check_branch
      %1337 = sbr.rel (0) target = $region41
    $region40: #{tpu_custom_call.1} parent=1 // pred_region
      %1338 = dma.done [#allocation4], 2048
    $region41: #{tpu_custom_call.1} parent=1 // pred_fallthru
      _
    %1339 = vsyncpa [#allocation3], 1
    %1340 = vsyncpa [#allocation6], 1
    %1341 = vsyncpa [#allocation4], 1

</llo_original>
